<compile_context>
chip_gen: v5e
topology: v5e:2x2
jax: 0.10.0
libtpu: 0.0.40
codegen_flags: <defaults>
</compile_context>

<pallas_src>
import functools

import jax
import jax.numpy as jnp
from jax.experimental import pallas as pl
from jax.experimental.pallas import tpu as pltpu


def _layer_norm(x, gamma, beta, eps=1e-5):
    # PyTorch nn.LayerNorm: biased variance, eps inside the sqrt. f32 math.
    mu = jnp.mean(x, axis=-1, keepdims=True)
    var = jnp.mean(jnp.square(x - mu), axis=-1, keepdims=True)
    inv = jax.lax.rsqrt(var + eps)
    return (x - mu) * inv * gamma + beta


def _gelu(x):
    # TODO(synk): nn.GELU() default is the exact erf GELU; tanh approximation
    # used since lax.erf is not guaranteed to lower in Mosaic.
    c = jnp.float32(0.7978845608028654)  # sqrt(2/pi)
    return 0.5 * x * (1.0 + jnp.tanh(c * (x + 0.044715 * x * x * x)))


def encoder_kernel(z_ref, pos_ref, convw_ref, convb_ref,
                   ln1_g_ref, ln1_b_ref,
                   wqkv_ref, bqkv_ref, wp_ref, bp_ref,
                   ln2_g_ref, ln2_b_ref,
                   w1_ref, b1_ref, w2_ref, b2_ref,
                   x_ref, *, num_heads):
    """grid = (batch_blocks, depth); x_ref (output) carries activations."""
    layer = pl.program_id(1)

    bb, S, E = x_ref.shape
    nh = num_heads
    dh = E // nh
    M = bb * S
    scale = jnp.float32(1.0 / (E ** 0.5))   # softmax(energy / sqrt(emb_size))

    # -------- prologue (layer 0): pos-embed add + 1x1 conv C -> E -----------
    @pl.when(layer == 0)
    def _prologue():
        zc = (z_ref[...] + pos_ref[...]).astype(jnp.bfloat16)       # (bb,S,C)
        x_ref[...] = (jnp.einsum('bsc,ce->bse', zc, convw_ref[...],
                                 preferred_element_type=jnp.float32)
                      + convb_ref[...])

    x = x_ref[...]                                                  # f32 carry

    # -------- ResidualAdd(LayerNorm -> MultiHeadAttention) ------------------
    h = _layer_norm(x, ln1_g_ref[...], ln1_b_ref[...])
    hb = h.reshape(M, E).astype(jnp.bfloat16)
    # fused QKV: one (M,E)@(E,3E) MXU matmul, f32 accumulate, bf16 re-cast
    qkv = (jnp.dot(hb, wqkv_ref[...], preferred_element_type=jnp.float32)
           + bqkv_ref[...]).astype(jnp.bfloat16)                    # (M, 3E)
    q3 = qkv[:, :E].reshape(bb, S, E)
    k3 = qkv[:, E:2 * E].reshape(bb, S, E)
    v3 = qkv[:, 2 * E:].reshape(bb, S, E)

    proj = bp_ref[...]                                              # (1,E) f32
    for hd in range(nh):
        lo, hi = hd * dh, (hd + 1) * dh
        qh = q3[:, :, lo:hi]
        kh = k3[:, :, lo:hi]
        vh = v3[:, :, lo:hi]
        en = jnp.einsum('bqd,bkd->bqk', qh, kh,
                        preferred_element_type=jnp.float32) * scale
        en = en - jnp.max(en, axis=-1, keepdims=True)
        p = jnp.exp(en)
        att = p * pl.reciprocal(jnp.sum(p, axis=-1, keepdims=True), approx=True)
        oh = jnp.einsum('bqk,bkd->bqd', att.astype(jnp.bfloat16), vh,
                        preferred_element_type=jnp.float32)         # (bb,S,dh)
        # per-head projection accumulation: no head re-pack stage needed
        proj = proj + jnp.dot(oh.reshape(M, dh).astype(jnp.bfloat16),
                              wp_ref[lo:hi, :],
                              preferred_element_type=jnp.float32)
    x = x + proj.reshape(bb, S, E)

    # -------- ResidualAdd(LayerNorm -> FeedForward(GELU)) -------------------
    h = _layer_norm(x, ln2_g_ref[...], ln2_b_ref[...])
    ff = (jnp.dot(h.reshape(M, E).astype(jnp.bfloat16), w1_ref[...],
                  preferred_element_type=jnp.float32) + b1_ref[...])
    ff = _gelu(ff)
    ff = (jnp.dot(ff.astype(jnp.bfloat16), w2_ref[...],
                  preferred_element_type=jnp.float32) + b2_ref[...])
    x = x + ff.reshape(bb, S, E)

    x_ref[...] = x   # carry to next layer; flushed to HBM after the last one


def l1_kernel(x_ref, w_ref, b_ref, o_ref):
    """flatten(B,S,E)->(B,S*E) @ l1_w + l1_b, as a K-split over the seq dim."""
    bb, S, _ = x_ref.shape
    x = x_ref[...]                                   # (bb, S, E) f32
    acc = b_ref[...].astype(jnp.float32)             # (1, latent)
    for s in range(S):
        acc = acc + jnp.dot(x[:, s, :].astype(jnp.bfloat16), w_ref[s],
                            preferred_element_type=jnp.float32)
    o_ref[:, 0, :] = acc


def init_params(key, *, channels, seq_len, embed_dim, num_heads, depth,
                latent_dim, expansion=4):
    E, S, C, D = embed_dim, seq_len, channels, depth
    H = expansion * E
    ks = jax.random.split(key, 16)

    def w16(k, shape, scale=0.1):   # matmul weights -> bf16 (MXU-native)
        return (scale * jax.random.normal(k, shape)).astype(jnp.bfloat16)

    def f32(k, shape, scale=0.1):   # biases -> f32
        return (scale * jax.random.normal(k, shape)).astype(jnp.float32)

    wq, wk, wv = (w16(ks[i], (D, E, E)) for i in (2, 4, 6))
    bq, bk, bv = (f32(ks[i], (D, 1, E)) for i in (3, 5, 7))
    return dict(
        # nn.Parameter(torch.zeros(1, channels, seq_len)) -> stored channel-last
        pos=jnp.zeros((1, S, C), jnp.float32),
        conv_w=w16(ks[0], (C, E)),                 # Conv2d 1x1 weight, (in,out)
        conv_b=f32(ks[1], (1, E)),
        ln1_g=jnp.ones((D, 1, E), jnp.float32),
        ln1_b=jnp.zeros((D, 1, E), jnp.float32),
        wqkv=jnp.concatenate([wq, wk, wv], axis=-1),   # (D, E, 3E), [Q|K|V]
        bqkv=jnp.concatenate([bq, bk, bv], axis=-1),   # (D, 1, 3E)
        wp=w16(ks[8], (D, E, E)), bp=f32(ks[9], (D, 1, E)),
        ln2_g=jnp.ones((D, 1, E), jnp.float32),
        ln2_b=jnp.zeros((D, 1, E), jnp.float32),
        w1=w16(ks[10], (D, E, H)), b1=f32(ks[11], (D, 1, H)),
        w2=w16(ks[12], (D, H, E)), b2=f32(ks[13], (D, 1, E)),
        # torch l1.weight is (latent, S*E); stored transposed then reshaped so
        # flattened feature s*E+e maps to [s, e].
        l1_w=w16(ks[14], (S * E, latent_dim)).reshape(S, E, latent_dim),
        l1_b=f32(ks[15], (1, latent_dim)),
    )


def _vmem_limit_bytes():
    # ~3/4 of physical VMEM per generation: ~48 MiB on v7x, ~96 MiB on v5e/v6e.
    try:
        cap = pltpu.get_tpu_info().vmem_capacity_bytes
    except Exception:
        cap = 64 * 1024 * 1024
    return (3 * cap) // 4


def inverse_generator(z_ncw, params, *, depth, num_heads, batch_block=None):
    """z_ncw: (B, channels, seq_len) like the PyTorch module. Returns (B, 1, latent)."""
    z = jnp.transpose(z_ncw, (0, 2, 1)).astype(jnp.float32)   # -> (B, S, C)
    B, S, C = z.shape
    E = params['conv_w'].shape[-1]
    H = params['w1'].shape[-1]
    latent = params['l1_b'].shape[-1]
    # Default: two batch blocks so both v7x TensorCores get work.  For
    # production, pick bb so M = bb*S is a multiple of 256 and large enough to
    # be MXU-bound (>= ~256 rows v5e/v7x, ~650 rows v6e for bf16 weights).
    if batch_block is None:
        batch_block = B // 2 if (B % 2 == 0 and B > 1) else B
    bb = batch_block
    assert B % bb == 0, (B, bb)
    assert E % num_heads == 0, (E, num_heads)
    vlim = _vmem_limit_bytes()

    def _whole(shape):
        n = len(shape)
        return pl.BlockSpec(shape, lambda b, l: (0,) * n)

    def _per_layer(tail):
        nd = len(tail)
        return pl.BlockSpec((None,) + tuple(tail), lambda b, l: (l,) + (0,) * nd)

    in_specs = [
        pl.BlockSpec((bb, S, C), lambda b, l: (b, 0, 0)),   # z
        _whole((1, S, C)),           # pos
        _whole((C, E)),              # conv_w
        _whole((1, E)),              # conv_b
        _per_layer((1, E)),          # ln1_g
        _per_layer((1, E)),          # ln1_b
        _per_layer((E, 3 * E)),      # wqkv (fused)
        _per_layer((1, 3 * E)),      # bqkv
        _per_layer((E, E)),          # wp
        _per_layer((1, E)),          # bp
        _per_layer((1, E)),          # ln2_g
        _per_layer((1, E)),          # ln2_b
        _per_layer((E, H)),          # w1
        _per_layer((1, H)),          # b1
        _per_layer((H, E)),          # w2
        _per_layer((1, E)),          # b2
    ]
    args = (z, params['pos'], params['conv_w'], params['conv_b'],
            params['ln1_g'], params['ln1_b'],
            params['wqkv'], params['bqkv'], params['wp'], params['bp'],
            params['ln2_g'], params['ln2_b'],
            params['w1'], params['b1'], params['w2'], params['b2'])

    x_enc = pl.pallas_call(
        functools.partial(encoder_kernel, num_heads=num_heads),
        out_shape=jax.ShapeDtypeStruct((B, S, E), jnp.float32),
        grid=(B // bb, depth),
        in_specs=in_specs,
        out_specs=pl.BlockSpec((bb, S, E), lambda b, l: (b, 0, 0)),
        compiler_params=pltpu.CompilerParams(
            dimension_semantics=("parallel", "arbitrary"),
            vmem_limit_bytes=vlim),
    )(*args)

    # flatten + l1 as its own tiny pallas_call so l1_w never competes with the
    # per-layer encoder weights for VMEM.
    # TODO(synk): pad latent to a multiple of 128 for a lane-dense final store.
    out = pl.pallas_call(
        l1_kernel,
        out_shape=jax.ShapeDtypeStruct((B, 1, latent), jnp.float32),
        grid=(B // bb,),
        in_specs=[
            pl.BlockSpec((bb, S, E), lambda b: (b, 0, 0)),
            pl.BlockSpec((S, E, latent), lambda b: (0, 0, 0)),
            pl.BlockSpec((1, latent), lambda b: (0, 0)),
        ],
        out_specs=pl.BlockSpec((bb, 1, latent), lambda b: (b, 0, 0)),
        compiler_params=pltpu.CompilerParams(
            dimension_semantics=("parallel",),
            vmem_limit_bytes=vlim),
    )(x_enc, params['l1_w'], params['l1_b'])
    return out   # (B, 1, latent), already matches torch's .unsqueeze(1)


if __name__ == "__main__":
    B, C, S, E, NH, DEPTH, LAT = 2, 4, 8, 16, 2, 2, 32

    key = jax.random.PRNGKey(0)
    pkey, zkey = jax.random.split(key)
    params = init_params(pkey, channels=C, seq_len=S, embed_dim=E,
                         num_heads=NH, depth=DEPTH, latent_dim=LAT)
    z = jax.random.normal(zkey, (B, C, S), jnp.float32)

    out = inverse_generator(z, params, depth=DEPTH, num_heads=NH)
    out = jax.block_until_ready(out)
    assert out.shape == (B, 1, LAT), out.shape
    assert bool(jnp.all(jnp.isfinite(out)))
    print("KERNEL_OK")
</pallas_src>

<mosaic_0001>
module attributes {stable_mosaic.version = 11 : i64} {
  func.func @encoder_kernel(%arg0: i32, %arg1: i32, %arg2: memref<1x8x4xf32, #tpu.memory_space<vmem>>, %arg3: memref<1x8x4xf32, #tpu.memory_space<vmem>>, %arg4: memref<4x16xbf16, #tpu.memory_space<vmem>>, %arg5: memref<1x16xf32, #tpu.memory_space<vmem>>, %arg6: memref<1x1x16xf32, #tpu.memory_space<vmem>>, %arg7: memref<1x1x16xf32, #tpu.memory_space<vmem>>, %arg8: memref<1x16x48xbf16, #tpu.memory_space<vmem>>, %arg9: memref<1x1x48xf32, #tpu.memory_space<vmem>>, %arg10: memref<1x16x16xbf16, #tpu.memory_space<vmem>>, %arg11: memref<1x1x16xf32, #tpu.memory_space<vmem>>, %arg12: memref<1x1x16xf32, #tpu.memory_space<vmem>>, %arg13: memref<1x1x16xf32, #tpu.memory_space<vmem>>, %arg14: memref<1x16x64xbf16, #tpu.memory_space<vmem>>, %arg15: memref<1x1x64xf32, #tpu.memory_space<vmem>>, %arg16: memref<1x64x16xbf16, #tpu.memory_space<vmem>>, %arg17: memref<1x1x16xf32, #tpu.memory_space<vmem>>, %arg18: memref<1x8x16xf32, #tpu.memory_space<vmem>>) attributes {dimension_semantics = [#tpu.dimension_semantics<parallel>, #tpu.dimension_semantics<arbitrary>], iteration_bounds = array<i64: 2, 2>, scalar_prefetch = 0 : i64, scratch_operands = 0 : i64, tpu.core_type = #tpu.core_type<tc>, window_params = [{transform_indices = @transform_0, window_bounds = array<i64: 1, 8, 4>}, {pipeline_mode = #tpu.pipeline_mode<synchronous>, transform_indices = @transform_1, window_bounds = array<i64: 1, 8, 4>}, {pipeline_mode = #tpu.pipeline_mode<synchronous>, transform_indices = @transform_2, window_bounds = array<i64: 4, 16>}, {pipeline_mode = #tpu.pipeline_mode<synchronous>, transform_indices = @transform_3, window_bounds = array<i64: 1, 16>}, {transform_indices = @transform_4, window_bounds = array<i64: 1, 1, 16>}, {transform_indices = @transform_5, window_bounds = array<i64: 1, 1, 16>}, {transform_indices = @transform_6, window_bounds = array<i64: 1, 16, 48>}, {transform_indices = @transform_7, window_bounds = array<i64: 1, 1, 48>}, {transform_indices = @transform_8, window_bounds = array<i64: 1, 16, 16>}, {transform_indices = @transform_9, window_bounds = array<i64: 1, 1, 16>}, {transform_indices = @transform_10, window_bounds = array<i64: 1, 1, 16>}, {transform_indices = @transform_11, window_bounds = array<i64: 1, 1, 16>}, {transform_indices = @transform_12, window_bounds = array<i64: 1, 16, 64>}, {transform_indices = @transform_13, window_bounds = array<i64: 1, 1, 64>}, {transform_indices = @transform_14, window_bounds = array<i64: 1, 64, 16>}, {transform_indices = @transform_15, window_bounds = array<i64: 1, 1, 16>}, {transform_indices = @transform_16, window_bounds = array<i64: 1, 8, 16>}]} {
    %c0_i32 = arith.constant 0 : i32
    %0 = arith.cmpi eq, %arg1, %c0_i32 : i32
    %1 = arith.extui %0 : i1 to i32
    %c0_i32_0 = arith.constant 0 : i32
    %2 = arith.cmpi ne, %1, %c0_i32_0 : i32
    scf.if %2 {
      %c0_72 = arith.constant 0 : index
      %c0_73 = arith.constant 0 : index
      %c0_74 = arith.constant 0 : index
      %162 = vector.load %arg2[%c0_72, %c0_73, %c0_74] : memref<1x8x4xf32, #tpu.memory_space<vmem>>, vector<1x8x4xf32>
      %c0_75 = arith.constant 0 : index
      %c0_76 = arith.constant 0 : index
      %c0_77 = arith.constant 0 : index
      %163 = vector.load %arg3[%c0_75, %c0_76, %c0_77] : memref<1x8x4xf32, #tpu.memory_space<vmem>>, vector<1x8x4xf32>
      %164 = arith.addf %162, %163 : vector<1x8x4xf32>
      %165 = arith.truncf %164 : vector<1x8x4xf32> to vector<1x8x4xbf16>
      %c0_78 = arith.constant 0 : index
      %c0_79 = arith.constant 0 : index
      %166 = vector.load %arg4[%c0_78, %c0_79] : memref<4x16xbf16, #tpu.memory_space<vmem>>, vector<4x16xbf16>
      "tpu.trace_start"() <{level = 10 : i32, message = "bsc,ce->bse"}> : () -> ()
      %cst_80 = arith.constant dense<0.000000e+00> : vector<1x8x16xf32>
      %167 = tpu.matmul %165, %166, %cst_80 {dimension_numbers = #tpu.dot_dimension_numbers<[2], [0], [0, 1], [1], [0, 0, 0, 1, 1, 1], [], []>} : vector<1x8x4xbf16>, vector<4x16xbf16>, vector<1x8x16xf32> -> vector<1x8x16xf32>
      "tpu.trace_stop"() : () -> ()
      %c0_81 = arith.constant 0 : index
      %c0_82 = arith.constant 0 : index
      %168 = vector.load %arg5[%c0_81, %c0_82] : memref<1x16xf32, #tpu.memory_space<vmem>>, vector<1x16xf32>
      %169 = vector.shape_cast %168 : vector<1x16xf32> to vector<1x1x16xf32>
      %170 = vector.broadcast %169 : vector<1x1x16xf32> to vector<1x8x16xf32>
      %171 = arith.addf %167, %170 : vector<1x8x16xf32>
      %c0_83 = arith.constant 0 : index
      %c0_84 = arith.constant 0 : index
      %c0_85 = arith.constant 0 : index
      %172 = vector.load %arg18[%c0_83, %c0_84, %c0_85] : memref<1x8x16xf32, #tpu.memory_space<vmem>>, vector<1x8x16xf32>
      tpu.vector_store %arg18[%c0_83, %c0_84, %c0_85], %171 {strides = array<i32>} : memref<1x8x16xf32, #tpu.memory_space<vmem>>, vector<1x8x16xf32>,
    } else {
    }
    %c0 = arith.constant 0 : index
    %c0_1 = arith.constant 0 : index
    %c0_2 = arith.constant 0 : index
    %3 = vector.load %arg18[%c0, %c0_1, %c0_2] : memref<1x8x16xf32, #tpu.memory_space<vmem>>, vector<1x8x16xf32>
    %c0_3 = arith.constant 0 : index
    %c0_4 = arith.constant 0 : index
    %c0_5 = arith.constant 0 : index
    %4 = vector.load %arg6[%c0_3, %c0_4, %c0_5] : memref<1x1x16xf32, #tpu.memory_space<vmem>>, vector<1x1x16xf32>
    %5 = vector.shape_cast %4 : vector<1x1x16xf32> to vector<1x16xf32>
    %c0_6 = arith.constant 0 : index
    %c0_7 = arith.constant 0 : index
    %c0_8 = arith.constant 0 : index
    %6 = vector.load %arg7[%c0_6, %c0_7, %c0_8] : memref<1x1x16xf32, #tpu.memory_space<vmem>>, vector<1x1x16xf32>
    %7 = vector.shape_cast %6 : vector<1x1x16xf32> to vector<1x16xf32>
    %cst = arith.constant dense<0.000000e+00> : vector<1x8xf32>
    %8 = vector.multi_reduction <add>, %3, %cst [2] : vector<1x8x16xf32> to vector<1x8xf32>
    %9 = vector.shape_cast %8 : vector<1x8xf32> to vector<1x8x1xf32>
    %cst_9 = arith.constant 1.600000e+01 : f32
    %10 = vector.broadcast %cst_9 : f32 to vector<1x8x1xf32>
    %11 = arith.divf %9, %10 : vector<1x8x1xf32>
    %12 = vector.broadcast %11 : vector<1x8x1xf32> to vector<1x8x16xf32>
    %13 = arith.subf %3, %12 : vector<1x8x16xf32>
    %14 = arith.mulf %13, %13 : vector<1x8x16xf32>
    %cst_10 = arith.constant dense<0.000000e+00> : vector<1x8xf32>
    %15 = vector.multi_reduction <add>, %14, %cst_10 [2] : vector<1x8x16xf32> to vector<1x8xf32>
    %16 = vector.shape_cast %15 : vector<1x8xf32> to vector<1x8x1xf32>
    %cst_11 = arith.constant 1.600000e+01 : f32
    %17 = vector.broadcast %cst_11 : f32 to vector<1x8x1xf32>
    %18 = arith.divf %16, %17 : vector<1x8x1xf32>
    %cst_12 = arith.constant 9.99999974E-6 : f32
    %19 = vector.broadcast %cst_12 : f32 to vector<1x8x1xf32>
    %20 = arith.addf %18, %19 : vector<1x8x1xf32>
    %21 = math.rsqrt %20 : vector<1x8x1xf32>
    %22 = vector.broadcast %11 : vector<1x8x1xf32> to vector<1x8x16xf32>
    %23 = arith.subf %3, %22 : vector<1x8x16xf32>
    %24 = vector.broadcast %21 : vector<1x8x1xf32> to vector<1x8x16xf32>
    %25 = arith.mulf %23, %24 : vector<1x8x16xf32>
    %26 = vector.shape_cast %5 : vector<1x16xf32> to vector<1x1x16xf32>
    %27 = vector.broadcast %26 : vector<1x1x16xf32> to vector<1x8x16xf32>
    %28 = arith.mulf %25, %27 : vector<1x8x16xf32>
    %29 = vector.shape_cast %7 : vector<1x16xf32> to vector<1x1x16xf32>
    %30 = vector.broadcast %29 : vector<1x1x16xf32> to vector<1x8x16xf32>
    %31 = arith.addf %28, %30 : vector<1x8x16xf32>
    %32 = vector.shape_cast %31 : vector<1x8x16xf32> to vector<8x16xf32>
    %33 = arith.truncf %32 : vector<8x16xf32> to vector<8x16xbf16>
    %c0_13 = arith.constant 0 : index
    %c0_14 = arith.constant 0 : index
    %c0_15 = arith.constant 0 : index
    %34 = vector.load %arg8[%c0_13, %c0_14, %c0_15] : memref<1x16x48xbf16, #tpu.memory_space<vmem>>, vector<1x16x48xbf16>
    %35 = vector.shape_cast %34 : vector<1x16x48xbf16> to vector<16x48xbf16>
    %cst_16 = arith.constant dense<0.000000e+00> : vector<8x48xf32>
    %36 = tpu.matmul %33, %35, %cst_16 {dimension_numbers = #tpu.dot_dimension_numbers<[1], [0], [0], [1], [0, 0, 1, 1], [], []>} : vector<8x16xbf16>, vector<16x48xbf16>, vector<8x48xf32> -> vector<8x48xf32>
    %c0_17 = arith.constant 0 : index
    %c0_18 = arith.constant 0 : index
    %c0_19 = arith.constant 0 : index
    %37 = vector.load %arg9[%c0_17, %c0_18, %c0_19] : memref<1x1x48xf32, #tpu.memory_space<vmem>>, vector<1x1x48xf32>
    %38 = vector.shape_cast %37 : vector<1x1x48xf32> to vector<1x48xf32>
    %39 = vector.broadcast %38 : vector<1x48xf32> to vector<8x48xf32>
    %40 = arith.addf %36, %39 : vector<8x48xf32>
    %41 = arith.truncf %40 : vector<8x48xf32> to vector<8x48xbf16>
    %42 = vector.extract_strided_slice %41 {offsets = [0, 0], sizes = [8, 16], strides = [1, 1]} : vector<8x48xbf16> to vector<8x16xbf16>
    %43 = vector.shape_cast %42 : vector<8x16xbf16> to vector<1x8x16xbf16>
    %44 = vector.extract_strided_slice %41 {offsets = [0, 16], sizes = [8, 16], strides = [1, 1]} : vector<8x48xbf16> to vector<8x16xbf16>
    %45 = vector.shape_cast %44 : vector<8x16xbf16> to vector<1x8x16xbf16>
    %46 = vector.extract_strided_slice %41 {offsets = [0, 32], sizes = [8, 16], strides = [1, 1]} : vector<8x48xbf16> to vector<8x16xbf16>
    %47 = vector.shape_cast %46 : vector<8x16xbf16> to vector<1x8x16xbf16>
    %c0_20 = arith.constant 0 : index
    %c0_21 = arith.constant 0 : index
    %c0_22 = arith.constant 0 : index
    %48 = vector.load %arg11[%c0_20, %c0_21, %c0_22] : memref<1x1x16xf32, #tpu.memory_space<vmem>>, vector<1x1x16xf32>
    %49 = vector.shape_cast %48 : vector<1x1x16xf32> to vector<1x16xf32>
    %50 = vector.extract_strided_slice %43 {offsets = [0, 0, 0], sizes = [1, 8, 8], strides = [1, 1, 1]} : vector<1x8x16xbf16> to vector<1x8x8xbf16>
    %51 = vector.extract_strided_slice %45 {offsets = [0, 0, 0], sizes = [1, 8, 8], strides = [1, 1, 1]} : vector<1x8x16xbf16> to vector<1x8x8xbf16>
    %52 = vector.extract_strided_slice %47 {offsets = [0, 0, 0], sizes = [1, 8, 8], strides = [1, 1, 1]} : vector<1x8x16xbf16> to vector<1x8x8xbf16>
    "tpu.trace_start"() <{level = 10 : i32, message = "bqd,bkd->bqk"}> : () -> ()
    %cst_23 = arith.constant dense<0.000000e+00> : vector<1x8x8xf32>
    %53 = tpu.matmul %50, %51, %cst_23 {dimension_numbers = #tpu.dot_dimension_numbers<[2], [2], [1], [1], [0, 0, 0, 1, 1, 1], [0], [0]>} : vector<1x8x8xbf16>, vector<1x8x8xbf16>, vector<1x8x8xf32> -> vector<1x8x8xf32>
    "tpu.trace_stop"() : () -> ()
    %cst_24 = arith.constant 2.500000e-01 : f32
    %54 = vector.broadcast %cst_24 : f32 to vector<1x8x8xf32>
    %55 = arith.mulf %53, %54 : vector<1x8x8xf32>
    %cst_25 = arith.constant dense<0xFF800000> : vector<1x8xf32>
    %56 = vector.multi_reduction <maximumf>, %55, %cst_25 [2] : vector<1x8x8xf32> to vector<1x8xf32>
    %57 = vector.shape_cast %56 : vector<1x8xf32> to vector<1x8x1xf32>
    %58 = vector.broadcast %57 : vector<1x8x1xf32> to vector<1x8x8xf32>
    %59 = arith.subf %55, %58 : vector<1x8x8xf32>
    %60 = math.exp %59 : vector<1x8x8xf32>
    %cst_26 = arith.constant dense<0.000000e+00> : vector<1x8xf32>
    %61 = vector.multi_reduction <add>, %60, %cst_26 [2] : vector<1x8x8xf32> to vector<1x8xf32>
    %62 = vector.shape_cast %61 : vector<1x8xf32> to vector<1x8x1xf32>
    %63 = tpu.reciprocal %62 {approx = true} : vector<1x8x1xf32> -> vector<1x8x1xf32>
    %64 = vector.broadcast %63 : vector<1x8x1xf32> to vector<1x8x8xf32>
    %65 = arith.mulf %60, %64 : vector<1x8x8xf32>
    %66 = arith.truncf %65 : vector<1x8x8xf32> to vector<1x8x8xbf16>
    "tpu.trace_start"() <{level = 10 : i32, message = "bqk,bkd->bqd"}> : () -> ()
    %cst_27 = arith.constant dense<0.000000e+00> : vector<1x8x8xf32>
    %67 = tpu.matmul %66, %52, %cst_27 {dimension_numbers = #tpu.dot_dimension_numbers<[2], [1], [1], [2], [0, 0, 0, 1, 1, 2], [0], [0]>} : vector<1x8x8xbf16>, vector<1x8x8xbf16>, vector<1x8x8xf32> -> vector<1x8x8xf32>
    "tpu.trace_stop"() : () -> ()
    %68 = vector.shape_cast %67 : vector<1x8x8xf32> to vector<8x8xf32>
    %69 = arith.truncf %68 : vector<8x8xf32> to vector<8x8xbf16>
    %c0_28 = arith.constant 0 : index
    %c0_29 = arith.constant 0 : index
    %c0_30 = arith.constant 0 : index
    %70 = vector.load %arg10[%c0_28, %c0_29, %c0_30] : memref<1x16x16xbf16, #tpu.memory_space<vmem>>, vector<1x8x16xbf16>
    %71 = vector.shape_cast %70 : vector<1x8x16xbf16> to vector<8x16xbf16>
    %cst_31 = arith.constant dense<0.000000e+00> : vector<8x16xf32>
    %72 = tpu.matmul %69, %71, %cst_31 {dimension_numbers = #tpu.dot_dimension_numbers<[1], [0], [0], [1], [0, 0, 1, 1], [], []>} : vector<8x8xbf16>, vector<8x16xbf16>, vector<8x16xf32> -> vector<8x16xf32>
    %73 = vector.broadcast %49 : vector<1x16xf32> to vector<8x16xf32>
    %74 = arith.addf %73, %72 : vector<8x16xf32>
    %75 = vector.extract_strided_slice %43 {offsets = [0, 0, 8], sizes = [1, 8, 8], strides = [1, 1, 1]} : vector<1x8x16xbf16> to vector<1x8x8xbf16>
    %76 = vector.extract_strided_slice %45 {offsets = [0, 0, 8], sizes = [1, 8, 8], strides = [1, 1, 1]} : vector<1x8x16xbf16> to vector<1x8x8xbf16>
    %77 = vector.extract_strided_slice %47 {offsets = [0, 0, 8], sizes = [1, 8, 8], strides = [1, 1, 1]} : vector<1x8x16xbf16> to vector<1x8x8xbf16>
    "tpu.trace_start"() <{level = 10 : i32, message = "bqd,bkd->bqk"}> : () -> ()
    %cst_32 = arith.constant dense<0.000000e+00> : vector<1x8x8xf32>
    %78 = tpu.matmul %75, %76, %cst_32 {dimension_numbers = #tpu.dot_dimension_numbers<[2], [2], [1], [1], [0, 0, 0, 1, 1, 1], [0], [0]>} : vector<1x8x8xbf16>, vector<1x8x8xbf16>, vector<1x8x8xf32> -> vector<1x8x8xf32>
    "tpu.trace_stop"() : () -> ()
    %cst_33 = arith.constant 2.500000e-01 : f32
    %79 = vector.broadcast %cst_33 : f32 to vector<1x8x8xf32>
    %80 = arith.mulf %78, %79 : vector<1x8x8xf32>
    %cst_34 = arith.constant dense<0xFF800000> : vector<1x8xf32>
    %81 = vector.multi_reduction <maximumf>, %80, %cst_34 [2] : vector<1x8x8xf32> to vector<1x8xf32>
    %82 = vector.shape_cast %81 : vector<1x8xf32> to vector<1x8x1xf32>
    %83 = vector.broadcast %82 : vector<1x8x1xf32> to vector<1x8x8xf32>
    %84 = arith.subf %80, %83 : vector<1x8x8xf32>
    %85 = math.exp %84 : vector<1x8x8xf32>
    %cst_35 = arith.constant dense<0.000000e+00> : vector<1x8xf32>
    %86 = vector.multi_reduction <add>, %85, %cst_35 [2] : vector<1x8x8xf32> to vector<1x8xf32>
    %87 = vector.shape_cast %86 : vector<1x8xf32> to vector<1x8x1xf32>
    %88 = tpu.reciprocal %87 {approx = true} : vector<1x8x1xf32> -> vector<1x8x1xf32>
    %89 = vector.broadcast %88 : vector<1x8x1xf32> to vector<1x8x8xf32>
    %90 = arith.mulf %85, %89 : vector<1x8x8xf32>
    %91 = arith.truncf %90 : vector<1x8x8xf32> to vector<1x8x8xbf16>
    "tpu.trace_start"() <{level = 10 : i32, message = "bqk,bkd->bqd"}> : () -> ()
    %cst_36 = arith.constant dense<0.000000e+00> : vector<1x8x8xf32>
    %92 = tpu.matmul %91, %77, %cst_36 {dimension_numbers = #tpu.dot_dimension_numbers<[2], [1], [1], [2], [0, 0, 0, 1, 1, 2], [0], [0]>} : vector<1x8x8xbf16>, vector<1x8x8xbf16>, vector<1x8x8xf32> -> vector<1x8x8xf32>
    "tpu.trace_stop"() : () -> ()
    %93 = vector.shape_cast %92 : vector<1x8x8xf32> to vector<8x8xf32>
    %94 = arith.truncf %93 : vector<8x8xf32> to vector<8x8xbf16>
    %c0_37 = arith.constant 0 : index
    %c8 = arith.constant 8 : index
    %c0_38 = arith.constant 0 : index
    %95 = vector.load %arg10[%c0_37, %c8, %c0_38] : memref<1x16x16xbf16, #tpu.memory_space<vmem>>, vector<1x8x16xbf16>
    %96 = vector.shape_cast %95 : vector<1x8x16xbf16> to vector<8x16xbf16>
    %cst_39 = arith.constant dense<0.000000e+00> : vector<8x16xf32>
    %97 = tpu.matmul %94, %96, %cst_39 {dimension_numbers = #tpu.dot_dimension_numbers<[1], [0], [0], [1], [0, 0, 1, 1], [], []>} : vector<8x8xbf16>, vector<8x16xbf16>, vector<8x16xf32> -> vector<8x16xf32>
    %98 = arith.addf %74, %97 : vector<8x16xf32>
    %99 = vector.shape_cast %98 : vector<8x16xf32> to vector<1x8x16xf32>
    %100 = arith.addf %3, %99 : vector<1x8x16xf32>
    %c0_40 = arith.constant 0 : index
    %c0_41 = arith.constant 0 : index
    %c0_42 = arith.constant 0 : index
    %101 = vector.load %arg12[%c0_40, %c0_41, %c0_42] : memref<1x1x16xf32, #tpu.memory_space<vmem>>, vector<1x1x16xf32>
    %102 = vector.shape_cast %101 : vector<1x1x16xf32> to vector<1x16xf32>
    %c0_43 = arith.constant 0 : index
    %c0_44 = arith.constant 0 : index
    %c0_45 = arith.constant 0 : index
    %103 = vector.load %arg13[%c0_43, %c0_44, %c0_45] : memref<1x1x16xf32, #tpu.memory_space<vmem>>, vector<1x1x16xf32>
    %104 = vector.shape_cast %103 : vector<1x1x16xf32> to vector<1x16xf32>
    %cst_46 = arith.constant dense<0.000000e+00> : vector<1x8xf32>
    %105 = vector.multi_reduction <add>, %100, %cst_46 [2] : vector<1x8x16xf32> to vector<1x8xf32>
    %106 = vector.shape_cast %105 : vector<1x8xf32> to vector<1x8x1xf32>
    %cst_47 = arith.constant 1.600000e+01 : f32
    %107 = vector.broadcast %cst_47 : f32 to vector<1x8x1xf32>
    %108 = arith.divf %106, %107 : vector<1x8x1xf32>
    %109 = vector.broadcast %108 : vector<1x8x1xf32> to vector<1x8x16xf32>
    %110 = arith.subf %100, %109 : vector<1x8x16xf32>
    %111 = arith.mulf %110, %110 : vector<1x8x16xf32>
    %cst_48 = arith.constant dense<0.000000e+00> : vector<1x8xf32>
    %112 = vector.multi_reduction <add>, %111, %cst_48 [2] : vector<1x8x16xf32> to vector<1x8xf32>
    %113 = vector.shape_cast %112 : vector<1x8xf32> to vector<1x8x1xf32>
    %cst_49 = arith.constant 1.600000e+01 : f32
    %114 = vector.broadcast %cst_49 : f32 to vector<1x8x1xf32>
    %115 = arith.divf %113, %114 : vector<1x8x1xf32>
    %cst_50 = arith.constant 9.99999974E-6 : f32
    %116 = vector.broadcast %cst_50 : f32 to vector<1x8x1xf32>
    %117 = arith.addf %115, %116 : vector<1x8x1xf32>
    %118 = math.rsqrt %117 : vector<1x8x1xf32>
    %119 = vector.broadcast %108 : vector<1x8x1xf32> to vector<1x8x16xf32>
    %120 = arith.subf %100, %119 : vector<1x8x16xf32>
    %121 = vector.broadcast %118 : vector<1x8x1xf32> to vector<1x8x16xf32>
    %122 = arith.mulf %120, %121 : vector<1x8x16xf32>
    %123 = vector.shape_cast %102 : vector<1x16xf32> to vector<1x1x16xf32>
    %124 = vector.broadcast %123 : vector<1x1x16xf32> to vector<1x8x16xf32>
    %125 = arith.mulf %122, %124 : vector<1x8x16xf32>
    %126 = vector.shape_cast %104 : vector<1x16xf32> to vector<1x1x16xf32>
    %127 = vector.broadcast %126 : vector<1x1x16xf32> to vector<1x8x16xf32>
    %128 = arith.addf %125, %127 : vector<1x8x16xf32>
    %129 = vector.shape_cast %128 : vector<1x8x16xf32> to vector<8x16xf32>
    %130 = arith.truncf %129 : vector<8x16xf32> to vector<8x16xbf16>
    %c0_51 = arith.constant 0 : index
    %c0_52 = arith.constant 0 : index
    %c0_53 = arith.constant 0 : index
    %131 = vector.load %arg14[%c0_51, %c0_52, %c0_53] : memref<1x16x64xbf16, #tpu.memory_space<vmem>>, vector<1x16x64xbf16>
    %132 = vector.shape_cast %131 : vector<1x16x64xbf16> to vector<16x64xbf16>
    %cst_54 = arith.constant dense<0.000000e+00> : vector<8x64xf32>
    %133 = tpu.matmul %130, %132, %cst_54 {dimension_numbers = #tpu.dot_dimension_numbers<[1], [0], [0], [1], [0, 0, 1, 1], [], []>} : vector<8x16xbf16>, vector<16x64xbf16>, vector<8x64xf32> -> vector<8x64xf32>
    %c0_55 = arith.constant 0 : index
    %c0_56 = arith.constant 0 : index
    %c0_57 = arith.constant 0 : index
    %134 = vector.load %arg15[%c0_55, %c0_56, %c0_57] : memref<1x1x64xf32, #tpu.memory_space<vmem>>, vector<1x1x64xf32>
    %135 = vector.shape_cast %134 : vector<1x1x64xf32> to vector<1x64xf32>
    %136 = vector.broadcast %135 : vector<1x64xf32> to vector<8x64xf32>
    %137 = arith.addf %133, %136 : vector<8x64xf32>
    %cst_58 = arith.constant 5.000000e-01 : f32
    %138 = vector.broadcast %cst_58 : f32 to vector<8x64xf32>
    %139 = arith.mulf %138, %137 : vector<8x64xf32>
    %cst_59 = arith.constant 4.471500e-02 : f32
    %140 = vector.broadcast %cst_59 : f32 to vector<8x64xf32>
    %141 = arith.mulf %140, %137 : vector<8x64xf32>
    %142 = arith.mulf %141, %137 : vector<8x64xf32>
    %143 = arith.mulf %142, %137 : vector<8x64xf32>
    %144 = arith.addf %137, %143 : vector<8x64xf32>
    %cst_60 = arith.constant 0.797884583 : f32
    %145 = vector.broadcast %cst_60 : f32 to vector<8x64xf32>
    %146 = arith.mulf %145, %144 : vector<8x64xf32>
    %147 = math.tanh %146 : vector<8x64xf32>
    %cst_61 = arith.constant 1.000000e+00 : f32
    %148 = vector.broadcast %cst_61 : f32 to vector<8x64xf32>
    %149 = arith.addf %148, %147 : vector<8x64xf32>
    %150 = arith.mulf %139, %149 : vector<8x64xf32>
    %151 = arith.truncf %150 : vector<8x64xf32> to vector<8x64xbf16>
    %c0_62 = arith.constant 0 : index
    %c0_63 = arith.constant 0 : index
    %c0_64 = arith.constant 0 : index
    %152 = vector.load %arg16[%c0_62, %c0_63, %c0_64] : memref<1x64x16xbf16, #tpu.memory_space<vmem>>, vector<1x64x16xbf16>
    %153 = vector.shape_cast %152 : vector<1x64x16xbf16> to vector<64x16xbf16>
    %cst_65 = arith.constant dense<0.000000e+00> : vector<8x16xf32>
    %154 = tpu.matmul %151, %153, %cst_65 {dimension_numbers = #tpu.dot_dimension_numbers<[1], [0], [0], [1], [0, 0, 1, 1], [], []>} : vector<8x64xbf16>, vector<64x16xbf16>, vector<8x16xf32> -> vector<8x16xf32>
    %c0_66 = arith.constant 0 : index
    %c0_67 = arith.constant 0 : index
    %c0_68 = arith.constant 0 : index
    %155 = vector.load %arg17[%c0_66, %c0_67, %c0_68] : memref<1x1x16xf32, #tpu.memory_space<vmem>>, vector<1x1x16xf32>
    %156 = vector.shape_cast %155 : vector<1x1x16xf32> to vector<1x16xf32>
    %157 = vector.broadcast %156 : vector<1x16xf32> to vector<8x16xf32>
    %158 = arith.addf %154, %157 : vector<8x16xf32>
    %159 = vector.shape_cast %158 : vector<8x16xf32> to vector<1x8x16xf32>
    %160 = arith.addf %100, %159 : vector<1x8x16xf32>
    %c0_69 = arith.constant 0 : index
    %c0_70 = arith.constant 0 : index
    %c0_71 = arith.constant 0 : index
    %161 = vector.load %arg18[%c0_69, %c0_70, %c0_71] : memref<1x8x16xf32, #tpu.memory_space<vmem>>, vector<1x8x16xf32>
    tpu.vector_store %arg18[%c0_69, %c0_70, %c0_71], %160 {strides = array<i32>} : memref<1x8x16xf32, #tpu.memory_space<vmem>>, vector<1x8x16xf32>,
    return
  }
  func.func @transform_0(%arg0: i32, %arg1: i32) -> (i32, i32, i32) {
    %c0_i32 = arith.constant 0 : i32
    %c0_i32_0 = arith.constant 0 : i32
    %c0_i32_1 = arith.constant 0 : i32
    return %arg0, %c0_i32, %c0_i32_0 : i32, i32, i32
  }
  func.func @transform_1(%arg0: i32, %arg1: i32) -> (i32, i32, i32) {
    %c0_i32 = arith.constant 0 : i32
    %c0_i32_0 = arith.constant 0 : i32
    %c0_i32_1 = arith.constant 0 : i32
    %c0_i32_2 = arith.constant 0 : i32
    return %c0_i32, %c0_i32_0, %c0_i32_1 : i32, i32, i32
  }
  func.func @transform_2(%arg0: i32, %arg1: i32) -> (i32, i32) {
    %c0_i32 = arith.constant 0 : i32
    %c0_i32_0 = arith.constant 0 : i32
    %c0_i32_1 = arith.constant 0 : i32
    return %c0_i32, %c0_i32_0 : i32, i32
  }
  func.func @transform_3(%arg0: i32, %arg1: i32) -> (i32, i32) {
    %c0_i32 = arith.constant 0 : i32
    %c0_i32_0 = arith.constant 0 : i32
    %c0_i32_1 = arith.constant 0 : i32
    return %c0_i32, %c0_i32_0 : i32, i32
  }
  func.func @transform_4(%arg0: i32, %arg1: i32) -> (i32, i32, i32) {
    %c0_i32 = arith.constant 0 : i32
    %c0_i32_0 = arith.constant 0 : i32
    %c0_i32_1 = arith.constant 0 : i32
    return %arg1, %c0_i32, %c0_i32_0 : i32, i32, i32
  }
  func.func @transform_5(%arg0: i32, %arg1: i32) -> (i32, i32, i32) {
    %c0_i32 = arith.constant 0 : i32
    %c0_i32_0 = arith.constant 0 : i32
    %c0_i32_1 = arith.constant 0 : i32
    return %arg1, %c0_i32, %c0_i32_0 : i32, i32, i32
  }
  func.func @transform_6(%arg0: i32, %arg1: i32) -> (i32, i32, i32) {
    %c0_i32 = arith.constant 0 : i32
    %c0_i32_0 = arith.constant 0 : i32
    %c0_i32_1 = arith.constant 0 : i32
    return %arg1, %c0_i32, %c0_i32_0 : i32, i32, i32
  }
  func.func @transform_7(%arg0: i32, %arg1: i32) -> (i32, i32, i32) {
    %c0_i32 = arith.constant 0 : i32
    %c0_i32_0 = arith.constant 0 : i32
    %c0_i32_1 = arith.constant 0 : i32
    return %arg1, %c0_i32, %c0_i32_0 : i32, i32, i32
  }
  func.func @transform_8(%arg0: i32, %arg1: i32) -> (i32, i32, i32) {
    %c0_i32 = arith.constant 0 : i32
    %c0_i32_0 = arith.constant 0 : i32
    %c0_i32_1 = arith.constant 0 : i32
    return %arg1, %c0_i32, %c0_i32_0 : i32, i32, i32
  }
  func.func @transform_9(%arg0: i32, %arg1: i32) -> (i32, i32, i32) {
    %c0_i32 = arith.constant 0 : i32
    %c0_i32_0 = arith.constant 0 : i32
    %c0_i32_1 = arith.constant 0 : i32
    return %arg1, %c0_i32, %c0_i32_0 : i32, i32, i32
  }
  func.func @transform_10(%arg0: i32, %arg1: i32) -> (i32, i32, i32) {
    %c0_i32 = arith.constant 0 : i32
    %c0_i32_0 = arith.constant 0 : i32
    %c0_i32_1 = arith.constant 0 : i32
    return %arg1, %c0_i32, %c0_i32_0 : i32, i32, i32
  }
  func.func @transform_11(%arg0: i32, %arg1: i32) -> (i32, i32, i32) {
    %c0_i32 = arith.constant 0 : i32
    %c0_i32_0 = arith.constant 0 : i32
    %c0_i32_1 = arith.constant 0 : i32
    return %arg1, %c0_i32, %c0_i32_0 : i32, i32, i32
  }
  func.func @transform_12(%arg0: i32, %arg1: i32) -> (i32, i32, i32) {
    %c0_i32 = arith.constant 0 : i32
    %c0_i32_0 = arith.constant 0 : i32
    %c0_i32_1 = arith.constant 0 : i32
    return %arg1, %c0_i32, %c0_i32_0 : i32, i32, i32
  }
  func.func @transform_13(%arg0: i32, %arg1: i32) -> (i32, i32, i32) {
    %c0_i32 = arith.constant 0 : i32
    %c0_i32_0 = arith.constant 0 : i32
    %c0_i32_1 = arith.constant 0 : i32
    return %arg1, %c0_i32, %c0_i32_0 : i32, i32, i32
  }
  func.func @transform_14(%arg0: i32, %arg1: i32) -> (i32, i32, i32) {
    %c0_i32 = arith.constant 0 : i32
    %c0_i32_0 = arith.constant 0 : i32
    %c0_i32_1 = arith.constant 0 : i32
    return %arg1, %c0_i32, %c0_i32_0 : i32, i32, i32
  }
  func.func @transform_15(%arg0: i32, %arg1: i32) -> (i32, i32, i32) {
    %c0_i32 = arith.constant 0 : i32
    %c0_i32_0 = arith.constant 0 : i32
    %c0_i32_1 = arith.constant 0 : i32
    return %arg1, %c0_i32, %c0_i32_0 : i32, i32, i32
  }
  func.func @transform_16(%arg0: i32, %arg1: i32) -> (i32, i32, i32) {
    %c0_i32 = arith.constant 0 : i32
    %c0_i32_0 = arith.constant 0 : i32
    %c0_i32_1 = arith.constant 0 : i32
    return %arg0, %c0_i32, %c0_i32_0 : i32, i32, i32
  }
}

</mosaic_0001>

<llo_original>
// kernel: tpu_custom_call.1
$region0: #{tpu_custom_call.1}
  #allocation0 [shape = 'u32[]', space=smem, size = 0x4, offset = 0x4, fixed_abs, tag = 'smem constant byte address 0x4 - core index']
  #allocation1 [shape = 'u32[72,128]{1,0:T(1,128)}', space=vmem, size = 0x9000, scoped, tag = 'internal scratch']
  %s0 = inlined_call_operand.vmem [shape: f32[2,8,4], index: 0, kind: input, shape index: {}]
  %s1 = inlined_call_operand.vmem [shape: f32[1,8,4], index: 1, kind: input, shape index: {}]
  %s2 = inlined_call_operand.vmem [shape: bf16[4,16], index: 2, kind: input, shape index: {}]
  %s3 = inlined_call_operand.vmem [shape: f32[1,16], index: 3, kind: input, shape index: {}]
  %s4 = inlined_call_operand.vmem [shape: f32[2,1,16], index: 4, kind: input, shape index: {}]
  %s5 = inlined_call_operand.vmem [shape: f32[2,1,16], index: 5, kind: input, shape index: {}]
  %s6 = inlined_call_operand.vmem [shape: bf16[2,16,48], index: 6, kind: input, shape index: {}]
  %s7 = inlined_call_operand.vmem [shape: f32[2,1,48], index: 7, kind: input, shape index: {}]
  %s8 = inlined_call_operand.vmem [shape: bf16[2,16,16], index: 8, kind: input, shape index: {}]
  %s9 = inlined_call_operand.vmem [shape: f32[2,1,16], index: 9, kind: input, shape index: {}]
  %s10 = inlined_call_operand.vmem [shape: f32[2,1,16], index: 10, kind: input, shape index: {}]
  %s11 = inlined_call_operand.vmem [shape: f32[2,1,16], index: 11, kind: input, shape index: {}]
  %s12 = inlined_call_operand.vmem [shape: bf16[2,16,64], index: 12, kind: input, shape index: {}]
  %s13 = inlined_call_operand.vmem [shape: f32[2,1,64], index: 13, kind: input, shape index: {}]
  %s14 = inlined_call_operand.vmem [shape: bf16[2,64,16], index: 14, kind: input, shape index: {}]
  %s15 = inlined_call_operand.vmem [shape: f32[2,1,16], index: 15, kind: input, shape index: {}]
  %s16 = inlined_call_operand.hbm [shape: f32[2,8,16], index: 16, kind: output, shape index: {}]
  %s17 = sld [smem:[#allocation0]]
  $region101: #{tpu_custom_call.1} parent=0
    _
  %s19 = ssub.s32 1, %s17
  %s20 = scalar_select 0, %s19, %s17
  $region1: #{tpu_custom_call.1} parent=0
    #allocation2 [shape = 'u8[8192]{0}', space=vmem, size = 0x2000, scoped, tag = 'output window, operand 0']
    #allocation3 [shape = 's32[2]{0}', space=sflag, size = 0x8, scoped, tag = 'scoped memory for tpu_custom_call.1']
    %21 = vsyncpa [#allocation3], 0
    %s22 = scalar_lea.sflag [#allocation3], 1
    %23 = vsyncpa %s22, 0
    loop: start=0, step=1, limit=6
    $region2: #{tpu_custom_call.1} parent=1 // loop_pre_header
      _
    $region3: #{tpu_custom_call.1} parent=1 // loop_header
      %s25 = sphi 0, %s29
      %p26 = scmp.ge.s32.totalorder %s25, 6
      %s32 = sphi 0, %s44
      %s33 = sphi 0, %s40
      %s34 = sphi 0, %s32
      %s35 = sphi 0, %s33
      %s36 = sphi 0, %s34
      %s37 = sphi 0, %s35
      %s47 = sphi 0, %s49
      %s50 = sphi 0, %s47
      %s51 = sphi 0, %s50
      %s67 = sphi 0, %s51
      %s71 = sphi 0, %s71
      %s73 = sphi 0, %s71
      %s74 = sphi 0, %s73
      %s88 = sphi 0, %s74
      %s92 = sphi 0, %s92
      %s94 = sphi 0, %s92
      %s95 = sphi 0, %s94
      %s109 = sphi 0, %s95
      %s113 = sphi 0, %s113
      %s115 = sphi 0, %s113
      %s116 = sphi 0, %s115
      %s130 = sphi 0, %s116
      %s136 = sphi 0, %s138
      %s139 = sphi 0, %s136
      %s140 = sphi 0, %s139
      %s156 = sphi 0, %s140
      %s162 = sphi 0, %s164
      %s165 = sphi 0, %s162
      %s166 = sphi 0, %s165
      %s182 = sphi 0, %s166
      %s188 = sphi 0, %s190
      %s191 = sphi 0, %s188
      %s192 = sphi 0, %s191
      %s208 = sphi 0, %s192
      %s214 = sphi 0, %s216
      %s217 = sphi 0, %s214
      %s218 = sphi 0, %s217
      %s234 = sphi 0, %s218
      %s240 = sphi 0, %s242
      %s243 = sphi 0, %s240
      %s244 = sphi 0, %s243
      %s260 = sphi 0, %s244
      %s266 = sphi 0, %s268
      %s269 = sphi 0, %s266
      %s270 = sphi 0, %s269
      %s286 = sphi 0, %s270
      %s292 = sphi 0, %s294
      %s295 = sphi 0, %s292
      %s296 = sphi 0, %s295
      %s312 = sphi 0, %s296
      %s318 = sphi 0, %s320
      %s321 = sphi 0, %s318
      %s322 = sphi 0, %s321
      %s338 = sphi 0, %s322
      %s344 = sphi 0, %s346
      %s347 = sphi 0, %s344
      %s348 = sphi 0, %s347
      %s364 = sphi 0, %s348
      %s370 = sphi 0, %s372
      %s373 = sphi 0, %s370
      %s374 = sphi 0, %s373
      %s390 = sphi 0, %s374
      %s396 = sphi 0, %s398
      %s399 = sphi 0, %s396
      %s400 = sphi 0, %s399
      %s416 = sphi 0, %s400
      %s422 = sphi 0, %s424
      %s425 = sphi 0, %s422
      %s426 = sphi 0, %s425
      %s442 = sphi 0, %s426
      %s448 = sphi 0, %s450
      %s451 = sphi 0, %s448
      %s452 = sphi 0, %s451
      %s468 = sphi 0, %s452
    $region4: #{tpu_custom_call.1} parent=1 // loop_header_branch
      %28 = sbr.rel (%p26) target = $region8
    $region5: #{tpu_custom_call.1} parent=1 // loop_body
      %s30 = ssub.s32 %s25, 1
      %s31 = ssub.s32 %s25, 2
      %s38 = sadd.s32 1, %s33
      %p39 = scmp.ge.s32.totalorder %s38, 2
      %s40 = scalar_select %p39, 0, %s38
      %s41 = sadd.s32 1, %s32
      %s42 = scalar_select %p39, %s41, %s32
      %p43 = scmp.ge.s32.totalorder %s42, 2
      %s44 = scalar_select %p43, 0, %s42
      %s45 = ssub.s32 %s32, %s44
      %p46 = scmp.eq.s32.totalorder %s45, 0
      %s48 = sadd.s32 %s47, 1
      %s49 = scalar_select %p46, %s47, %s48
      %p52 = pneg %p46
      %p53 = scmp.eq.s32.totalorder %s25, 3
      %p54 = por %p52, %p53
      %p55 = scmp.ne.s32.totalorder %s47, %s50
      %p56 = scmp.eq.s32.totalorder %s25, 0
      %p57 = por %p55, %p56
      %p58 = scmp.ne.s32.totalorder %s47, %s50
      %p59 = scmp.eq.s32.totalorder %s30, 3
      %p60 = por %p58, %p59
      %p61 = scmp.ne.s32.totalorder %s50, %s51
      %p62 = scmp.eq.s32.totalorder %s30, 0
      %p63 = por %p61, %p62
      %p64 = scmp.ne.s32.totalorder %s50, %s51
      %p65 = scmp.eq.s32.totalorder %s31, 3
      %p66 = por %p64, %p65
      %p68 = scmp.ne.s32.totalorder %s51, %s67
      %p69 = scmp.eq.s32.totalorder %s31, 0
      %p70 = por %p68, %p69
      %s72 = sadd.s32 %s71, 1
      %p75 = scmp.eq.s32.totalorder %s25, 3
      %p76 = scmp.ne.s32.totalorder %s71, %s73
      %p77 = scmp.eq.s32.totalorder %s25, 0
      %p78 = por %p76, %p77
      %p79 = scmp.ne.s32.totalorder %s71, %s73
      %p80 = scmp.eq.s32.totalorder %s30, 3
      %p81 = por %p79, %p80
      %p82 = scmp.ne.s32.totalorder %s73, %s74
      %p83 = scmp.eq.s32.totalorder %s30, 0
      %p84 = por %p82, %p83
      %p85 = scmp.ne.s32.totalorder %s73, %s74
      %p86 = scmp.eq.s32.totalorder %s31, 3
      %p87 = por %p85, %p86
      %p89 = scmp.ne.s32.totalorder %s74, %s88
      %p90 = scmp.eq.s32.totalorder %s31, 0
      %p91 = por %p89, %p90
      %s93 = sadd.s32 %s92, 1
      %p96 = scmp.eq.s32.totalorder %s25, 3
      %p97 = scmp.ne.s32.totalorder %s92, %s94
      %p98 = scmp.eq.s32.totalorder %s25, 0
      %p99 = por %p97, %p98
      %p100 = scmp.ne.s32.totalorder %s92, %s94
      %p101 = scmp.eq.s32.totalorder %s30, 3
      %p102 = por %p100, %p101
      %p103 = scmp.ne.s32.totalorder %s94, %s95
      %p104 = scmp.eq.s32.totalorder %s30, 0
      %p105 = por %p103, %p104
      %p106 = scmp.ne.s32.totalorder %s94, %s95
      %p107 = scmp.eq.s32.totalorder %s31, 3
      %p108 = por %p106, %p107
      %p110 = scmp.ne.s32.totalorder %s95, %s109
      %p111 = scmp.eq.s32.totalorder %s31, 0
      %p112 = por %p110, %p111
      %s114 = sadd.s32 %s113, 1
      %p117 = scmp.eq.s32.totalorder %s25, 3
      %p118 = scmp.ne.s32.totalorder %s113, %s115
      %p119 = scmp.eq.s32.totalorder %s25, 0
      %p120 = por %p118, %p119
      %p121 = scmp.ne.s32.totalorder %s113, %s115
      %p122 = scmp.eq.s32.totalorder %s30, 3
      %p123 = por %p121, %p122
      %p124 = scmp.ne.s32.totalorder %s115, %s116
      %p125 = scmp.eq.s32.totalorder %s30, 0
      %p126 = por %p124, %p125
      %p127 = scmp.ne.s32.totalorder %s115, %s116
      %p128 = scmp.eq.s32.totalorder %s31, 3
      %p129 = por %p127, %p128
      %p131 = scmp.ne.s32.totalorder %s116, %s130
      %p132 = scmp.eq.s32.totalorder %s31, 0
      %p133 = por %p131, %p132
      %s134 = ssub.s32 %s33, %s40
      %p135 = scmp.eq.s32.totalorder %s134, 0
      %s137 = sadd.s32 %s136, 1
      %s138 = scalar_select %p135, %s136, %s137
      %p141 = pneg %p135
      %p142 = scmp.eq.s32.totalorder %s25, 3
      %p143 = por %p141, %p142
      %p144 = scmp.ne.s32.totalorder %s136, %s139
      %p145 = scmp.eq.s32.totalorder %s25, 0
      %p146 = por %p144, %p145
      %p147 = scmp.ne.s32.totalorder %s136, %s139
      %p148 = scmp.eq.s32.totalorder %s30, 3
      %p149 = por %p147, %p148
      %p150 = scmp.ne.s32.totalorder %s139, %s140
      %p151 = scmp.eq.s32.totalorder %s30, 0
      %p152 = por %p150, %p151
      %p153 = scmp.ne.s32.totalorder %s139, %s140
      %p154 = scmp.eq.s32.totalorder %s31, 3
      %p155 = por %p153, %p154
      %p157 = scmp.ne.s32.totalorder %s140, %s156
      %p158 = scmp.eq.s32.totalorder %s31, 0
      %p159 = por %p157, %p158
      %s160 = ssub.s32 %s33, %s40
      %p161 = scmp.eq.s32.totalorder %s160, 0
      %s163 = sadd.s32 %s162, 1
      %s164 = scalar_select %p161, %s162, %s163
      %p167 = pneg %p161
      %p168 = scmp.eq.s32.totalorder %s25, 3
      %p169 = por %p167, %p168
      %p170 = scmp.ne.s32.totalorder %s162, %s165
      %p171 = scmp.eq.s32.totalorder %s25, 0
      %p172 = por %p170, %p171
      %p173 = scmp.ne.s32.totalorder %s162, %s165
      %p174 = scmp.eq.s32.totalorder %s30, 3
      %p175 = por %p173, %p174
      %p176 = scmp.ne.s32.totalorder %s165, %s166
      %p177 = scmp.eq.s32.totalorder %s30, 0
      %p178 = por %p176, %p177
      %p179 = scmp.ne.s32.totalorder %s165, %s166
      %p180 = scmp.eq.s32.totalorder %s31, 3
      %p181 = por %p179, %p180
      %p183 = scmp.ne.s32.totalorder %s166, %s182
      %p184 = scmp.eq.s32.totalorder %s31, 0
      %p185 = por %p183, %p184
      %s186 = ssub.s32 %s33, %s40
      %p187 = scmp.eq.s32.totalorder %s186, 0
      %s189 = sadd.s32 %s188, 1
      %s190 = scalar_select %p187, %s188, %s189
      %p193 = pneg %p187
      %p194 = scmp.eq.s32.totalorder %s25, 3
      %p195 = por %p193, %p194
      %p196 = scmp.ne.s32.totalorder %s188, %s191
      %p197 = scmp.eq.s32.totalorder %s25, 0
      %p198 = por %p196, %p197
      %p199 = scmp.ne.s32.totalorder %s188, %s191
      %p200 = scmp.eq.s32.totalorder %s30, 3
      %p201 = por %p199, %p200
      %p202 = scmp.ne.s32.totalorder %s191, %s192
      %p203 = scmp.eq.s32.totalorder %s30, 0
      %p204 = por %p202, %p203
      %p205 = scmp.ne.s32.totalorder %s191, %s192
      %p206 = scmp.eq.s32.totalorder %s31, 3
      %p207 = por %p205, %p206
      %p209 = scmp.ne.s32.totalorder %s192, %s208
      %p210 = scmp.eq.s32.totalorder %s31, 0
      %p211 = por %p209, %p210
      %s212 = ssub.s32 %s33, %s40
      %p213 = scmp.eq.s32.totalorder %s212, 0
      %s215 = sadd.s32 %s214, 1
      %s216 = scalar_select %p213, %s214, %s215
      %p219 = pneg %p213
      %p220 = scmp.eq.s32.totalorder %s25, 3
      %p221 = por %p219, %p220
      %p222 = scmp.ne.s32.totalorder %s214, %s217
      %p223 = scmp.eq.s32.totalorder %s25, 0
      %p224 = por %p222, %p223
      %p225 = scmp.ne.s32.totalorder %s214, %s217
      %p226 = scmp.eq.s32.totalorder %s30, 3
      %p227 = por %p225, %p226
      %p228 = scmp.ne.s32.totalorder %s217, %s218
      %p229 = scmp.eq.s32.totalorder %s30, 0
      %p230 = por %p228, %p229
      %p231 = scmp.ne.s32.totalorder %s217, %s218
      %p232 = scmp.eq.s32.totalorder %s31, 3
      %p233 = por %p231, %p232
      %p235 = scmp.ne.s32.totalorder %s218, %s234
      %p236 = scmp.eq.s32.totalorder %s31, 0
      %p237 = por %p235, %p236
      %s238 = ssub.s32 %s33, %s40
      %p239 = scmp.eq.s32.totalorder %s238, 0
      %s241 = sadd.s32 %s240, 1
      %s242 = scalar_select %p239, %s240, %s241
      %p245 = pneg %p239
      %p246 = scmp.eq.s32.totalorder %s25, 3
      %p247 = por %p245, %p246
      %p248 = scmp.ne.s32.totalorder %s240, %s243
      %p249 = scmp.eq.s32.totalorder %s25, 0
      %p250 = por %p248, %p249
      %p251 = scmp.ne.s32.totalorder %s240, %s243
      %p252 = scmp.eq.s32.totalorder %s30, 3
      %p253 = por %p251, %p252
      %p254 = scmp.ne.s32.totalorder %s243, %s244
      %p255 = scmp.eq.s32.totalorder %s30, 0
      %p256 = por %p254, %p255
      %p257 = scmp.ne.s32.totalorder %s243, %s244
      %p258 = scmp.eq.s32.totalorder %s31, 3
      %p259 = por %p257, %p258
      %p261 = scmp.ne.s32.totalorder %s244, %s260
      %p262 = scmp.eq.s32.totalorder %s31, 0
      %p263 = por %p261, %p262
      %s264 = ssub.s32 %s33, %s40
      %p265 = scmp.eq.s32.totalorder %s264, 0
      %s267 = sadd.s32 %s266, 1
      %s268 = scalar_select %p265, %s266, %s267
      %p271 = pneg %p265
      %p272 = scmp.eq.s32.totalorder %s25, 3
      %p273 = por %p271, %p272
      %p274 = scmp.ne.s32.totalorder %s266, %s269
      %p275 = scmp.eq.s32.totalorder %s25, 0
      %p276 = por %p274, %p275
      %p277 = scmp.ne.s32.totalorder %s266, %s269
      %p278 = scmp.eq.s32.totalorder %s30, 3
      %p279 = por %p277, %p278
      %p280 = scmp.ne.s32.totalorder %s269, %s270
      %p281 = scmp.eq.s32.totalorder %s30, 0
      %p282 = por %p280, %p281
      %p283 = scmp.ne.s32.totalorder %s269, %s270
      %p284 = scmp.eq.s32.totalorder %s31, 3
      %p285 = por %p283, %p284
      %p287 = scmp.ne.s32.totalorder %s270, %s286
      %p288 = scmp.eq.s32.totalorder %s31, 0
      %p289 = por %p287, %p288
      %s290 = ssub.s32 %s33, %s40
      %p291 = scmp.eq.s32.totalorder %s290, 0
      %s293 = sadd.s32 %s292, 1
      %s294 = scalar_select %p291, %s292, %s293
      %p297 = pneg %p291
      %p298 = scmp.eq.s32.totalorder %s25, 3
      %p299 = por %p297, %p298
      %p300 = scmp.ne.s32.totalorder %s292, %s295
      %p301 = scmp.eq.s32.totalorder %s25, 0
      %p302 = por %p300, %p301
      %p303 = scmp.ne.s32.totalorder %s292, %s295
      %p304 = scmp.eq.s32.totalorder %s30, 3
      %p305 = por %p303, %p304
      %p306 = scmp.ne.s32.totalorder %s295, %s296
      %p307 = scmp.eq.s32.totalorder %s30, 0
      %p308 = por %p306, %p307
      %p309 = scmp.ne.s32.totalorder %s295, %s296
      %p310 = scmp.eq.s32.totalorder %s31, 3
      %p311 = por %p309, %p310
      %p313 = scmp.ne.s32.totalorder %s296, %s312
      %p314 = scmp.eq.s32.totalorder %s31, 0
      %p315 = por %p313, %p314
      %s316 = ssub.s32 %s33, %s40
      %p317 = scmp.eq.s32.totalorder %s316, 0
      %s319 = sadd.s32 %s318, 1
      %s320 = scalar_select %p317, %s318, %s319
      %p323 = pneg %p317
      %p324 = scmp.eq.s32.totalorder %s25, 3
      %p325 = por %p323, %p324
      %p326 = scmp.ne.s32.totalorder %s318, %s321
      %p327 = scmp.eq.s32.totalorder %s25, 0
      %p328 = por %p326, %p327
      %p329 = scmp.ne.s32.totalorder %s318, %s321
      %p330 = scmp.eq.s32.totalorder %s30, 3
      %p331 = por %p329, %p330
      %p332 = scmp.ne.s32.totalorder %s321, %s322
      %p333 = scmp.eq.s32.totalorder %s30, 0
      %p334 = por %p332, %p333
      %p335 = scmp.ne.s32.totalorder %s321, %s322
      %p336 = scmp.eq.s32.totalorder %s31, 3
      %p337 = por %p335, %p336
      %p339 = scmp.ne.s32.totalorder %s322, %s338
      %p340 = scmp.eq.s32.totalorder %s31, 0
      %p341 = por %p339, %p340
      %s342 = ssub.s32 %s33, %s40
      %p343 = scmp.eq.s32.totalorder %s342, 0
      %s345 = sadd.s32 %s344, 1
      %s346 = scalar_select %p343, %s344, %s345
      %p349 = pneg %p343
      %p350 = scmp.eq.s32.totalorder %s25, 3
      %p351 = por %p349, %p350
      %p352 = scmp.ne.s32.totalorder %s344, %s347
      %p353 = scmp.eq.s32.totalorder %s25, 0
      %p354 = por %p352, %p353
      %p355 = scmp.ne.s32.totalorder %s344, %s347
      %p356 = scmp.eq.s32.totalorder %s30, 3
      %p357 = por %p355, %p356
      %p358 = scmp.ne.s32.totalorder %s347, %s348
      %p359 = scmp.eq.s32.totalorder %s30, 0
      %p360 = por %p358, %p359
      %p361 = scmp.ne.s32.totalorder %s347, %s348
      %p362 = scmp.eq.s32.totalorder %s31, 3
      %p363 = por %p361, %p362
      %p365 = scmp.ne.s32.totalorder %s348, %s364
      %p366 = scmp.eq.s32.totalorder %s31, 0
      %p367 = por %p365, %p366
      %s368 = ssub.s32 %s33, %s40
      %p369 = scmp.eq.s32.totalorder %s368, 0
      %s371 = sadd.s32 %s370, 1
      %s372 = scalar_select %p369, %s370, %s371
      %p375 = pneg %p369
      %p376 = scmp.eq.s32.totalorder %s25, 3
      %p377 = por %p375, %p376
      %p378 = scmp.ne.s32.totalorder %s370, %s373
      %p379 = scmp.eq.s32.totalorder %s25, 0
      %p380 = por %p378, %p379
      %p381 = scmp.ne.s32.totalorder %s370, %s373
      %p382 = scmp.eq.s32.totalorder %s30, 3
      %p383 = por %p381, %p382
      %p384 = scmp.ne.s32.totalorder %s373, %s374
      %p385 = scmp.eq.s32.totalorder %s30, 0
      %p386 = por %p384, %p385
      %p387 = scmp.ne.s32.totalorder %s373, %s374
      %p388 = scmp.eq.s32.totalorder %s31, 3
      %p389 = por %p387, %p388
      %p391 = scmp.ne.s32.totalorder %s374, %s390
      %p392 = scmp.eq.s32.totalorder %s31, 0
      %p393 = por %p391, %p392
      %s394 = ssub.s32 %s33, %s40
      %p395 = scmp.eq.s32.totalorder %s394, 0
      %s397 = sadd.s32 %s396, 1
      %s398 = scalar_select %p395, %s396, %s397
      %p401 = pneg %p395
      %p402 = scmp.eq.s32.totalorder %s25, 3
      %p403 = por %p401, %p402
      %p404 = scmp.ne.s32.totalorder %s396, %s399
      %p405 = scmp.eq.s32.totalorder %s25, 0
      %p406 = por %p404, %p405
      %p407 = scmp.ne.s32.totalorder %s396, %s399
      %p408 = scmp.eq.s32.totalorder %s30, 3
      %p409 = por %p407, %p408
      %p410 = scmp.ne.s32.totalorder %s399, %s400
      %p411 = scmp.eq.s32.totalorder %s30, 0
      %p412 = por %p410, %p411
      %p413 = scmp.ne.s32.totalorder %s399, %s400
      %p414 = scmp.eq.s32.totalorder %s31, 3
      %p415 = por %p413, %p414
      %p417 = scmp.ne.s32.totalorder %s400, %s416
      %p418 = scmp.eq.s32.totalorder %s31, 0
      %p419 = por %p417, %p418
      %s420 = ssub.s32 %s33, %s40
      %p421 = scmp.eq.s32.totalorder %s420, 0
      %s423 = sadd.s32 %s422, 1
      %s424 = scalar_select %p421, %s422, %s423
      %p427 = pneg %p421
      %p428 = scmp.eq.s32.totalorder %s25, 3
      %p429 = por %p427, %p428
      %p430 = scmp.ne.s32.totalorder %s422, %s425
      %p431 = scmp.eq.s32.totalorder %s25, 0
      %p432 = por %p430, %p431
      %p433 = scmp.ne.s32.totalorder %s422, %s425
      %p434 = scmp.eq.s32.totalorder %s30, 3
      %p435 = por %p433, %p434
      %p436 = scmp.ne.s32.totalorder %s425, %s426
      %p437 = scmp.eq.s32.totalorder %s30, 0
      %p438 = por %p436, %p437
      %p439 = scmp.ne.s32.totalorder %s425, %s426
      %p440 = scmp.eq.s32.totalorder %s31, 3
      %p441 = por %p439, %p440
      %p443 = scmp.ne.s32.totalorder %s426, %s442
      %p444 = scmp.eq.s32.totalorder %s31, 0
      %p445 = por %p443, %p444
      %s446 = ssub.s32 %s32, %s44
      %p447 = scmp.eq.s32.totalorder %s446, 0
      %s449 = sadd.s32 %s448, 1
      %s450 = scalar_select %p447, %s448, %s449
      %p453 = pneg %p447
      %p454 = scmp.eq.s32.totalorder %s25, 3
      %p455 = por %p453, %p454
      %p456 = scmp.ne.s32.totalorder %s448, %s451
      %p457 = scmp.eq.s32.totalorder %s25, 0
      %p458 = por %p456, %p457
      %p459 = scmp.ne.s32.totalorder %s448, %s451
      %p460 = scmp.eq.s32.totalorder %s30, 3
      %p461 = por %p459, %p460
      %p462 = scmp.ne.s32.totalorder %s451, %s452
      %p463 = scmp.eq.s32.totalorder %s30, 0
      %p464 = por %p462, %p463
      %p465 = scmp.ne.s32.totalorder %s451, %s452
      %p466 = scmp.eq.s32.totalorder %s31, 3
      %p467 = por %p465, %p466
      %p469 = scmp.ne.s32.totalorder %s452, %s468
      %p470 = scmp.eq.s32.totalorder %s31, 0
      %p471 = por %p469, %p470
      %p472 = scmp.le.s32.totalorder 1, %s25
      %p473 = scmp.lt.s32.totalorder %s25, 5
      %p474 = pnand %p472, %p473
      %p475 = pneg %p474
      // Predicated region
      $region9: #{tpu_custom_call.1} parent=5 // pred_check
        _
      $region10: #{tpu_custom_call.1} parent=5 // pred_check_branch
        %477 = sbr.rel (%p474) target = $region12
      $region11: #{tpu_custom_call.1} parent=5 // pred_region
        %s478 = ssub.s32 %s25, 1
        // Predicated region
        $region13: #{tpu_custom_call.1} parent=11 // pred_check
          %p479 = pneg %p84
        $region14: #{tpu_custom_call.1} parent=11 // pred_check_branch
          %481 = sbr.rel (%p479) target = $region16
        $region15: #{tpu_custom_call.1} parent=11 // pred_region
          _
        $region16: #{tpu_custom_call.1} parent=11 // pred_fallthru
          _
        // Predicated region
        $region17: #{tpu_custom_call.1} parent=11 // pred_check
          %p482 = pneg %p105
        $region18: #{tpu_custom_call.1} parent=11 // pred_check_branch
          %484 = sbr.rel (%p482) target = $region20
        $region19: #{tpu_custom_call.1} parent=11 // pred_region
          _
        $region20: #{tpu_custom_call.1} parent=11 // pred_fallthru
          _
        // Predicated region
        $region21: #{tpu_custom_call.1} parent=11 // pred_check
          %p485 = pneg %p126
        $region22: #{tpu_custom_call.1} parent=11 // pred_check_branch
          %487 = sbr.rel (%p485) target = $region24
        $region23: #{tpu_custom_call.1} parent=11 // pred_region
          _
        $region24: #{tpu_custom_call.1} parent=11 // pred_fallthru
          _
      $region12: #{tpu_custom_call.1} parent=5 // pred_fallthru
        _
      %p488 = scmp.lt.s32.totalorder %s25, 4
      // Predicated region
      $region25: #{tpu_custom_call.1} parent=5 // pred_check
        %p489 = pneg %p488
      $region26: #{tpu_custom_call.1} parent=5 // pred_check_branch
        %491 = sbr.rel (%p489) target = $region28
      $region27: #{tpu_custom_call.1} parent=5 // pred_region
        // Predicated region
        $region29: #{tpu_custom_call.1} parent=27 // pred_check
          %p492 = pneg %p57
        $region30: #{tpu_custom_call.1} parent=27 // pred_check_branch
          %494 = sbr.rel (%p492) target = $region32
        $region31: #{tpu_custom_call.1} parent=27 // pred_region
          %p495 = scmp.lt.s32.totalorder %s32, 1
          %s496 = scalar_select %p495, %s32, 1
          %s497 = smul.addr %s496, 8
          %s498 = scalar_lea.vmem %s0, %s497
        $region32: #{tpu_custom_call.1} parent=27 // pred_fallthru
          _
        // Predicated region
        $region33: #{tpu_custom_call.1} parent=27 // pred_check
          %p499 = pneg %p146
        $region34: #{tpu_custom_call.1} parent=27 // pred_check_branch
          %501 = sbr.rel (%p499) target = $region36
        $region35: #{tpu_custom_call.1} parent=27 // pred_region
          %p502 = scmp.lt.s32.totalorder %s33, 1
          %s503 = scalar_select %p502, %s33, 1
          %s504 = scalar_lea.vmem %s4, %s503
        $region36: #{tpu_custom_call.1} parent=27 // pred_fallthru
          _
        // Predicated region
        $region37: #{tpu_custom_call.1} parent=27 // pred_check
          %p505 = pneg %p172
        $region38: #{tpu_custom_call.1} parent=27 // pred_check_branch
          %507 = sbr.rel (%p505) target = $region40
        $region39: #{tpu_custom_call.1} parent=27 // pred_region
          %p508 = scmp.lt.s32.totalorder %s33, 1
          %s509 = scalar_select %p508, %s33, 1
          %s510 = scalar_lea.vmem %s5, %s509
        $region40: #{tpu_custom_call.1} parent=27 // pred_fallthru
          _
        // Predicated region
        $region41: #{tpu_custom_call.1} parent=27 // pred_check
          %p511 = pneg %p198
        $region42: #{tpu_custom_call.1} parent=27 // pred_check_branch
          %513 = sbr.rel (%p511) target = $region44
        $region43: #{tpu_custom_call.1} parent=27 // pred_region
          %p514 = scmp.lt.s32.totalorder %s33, 1
          %s515 = scalar_select %p514, %s33, 1
          %s516 = smul.addr %s515, 2
          %s517 = smul.addr %s516, 4
          %s518 = scalar_lea.vmem %s6, %s517
        $region44: #{tpu_custom_call.1} parent=27 // pred_fallthru
          _
        // Predicated region
        $region45: #{tpu_custom_call.1} parent=27 // pred_check
          %p519 = pneg %p224
        $region46: #{tpu_custom_call.1} parent=27 // pred_check_branch
          %521 = sbr.rel (%p519) target = $region48
        $region47: #{tpu_custom_call.1} parent=27 // pred_region
          %p522 = scmp.lt.s32.totalorder %s33, 1
          %s523 = scalar_select %p522, %s33, 1
          %s524 = scalar_lea.vmem %s7, %s523
        $region48: #{tpu_custom_call.1} parent=27 // pred_fallthru
          _
        // Predicated region
        $region49: #{tpu_custom_call.1} parent=27 // pred_check
          %p525 = pneg %p250
        $region50: #{tpu_custom_call.1} parent=27 // pred_check_branch
          %527 = sbr.rel (%p525) target = $region52
        $region51: #{tpu_custom_call.1} parent=27 // pred_region
          %p528 = scmp.lt.s32.totalorder %s33, 1
          %s529 = scalar_select %p528, %s33, 1
          %s530 = smul.addr %s529, 2
          %s531 = smul.addr %s530, 4
          %s532 = scalar_lea.vmem %s8, %s531
        $region52: #{tpu_custom_call.1} parent=27 // pred_fallthru
          _
        // Predicated region
        $region53: #{tpu_custom_call.1} parent=27 // pred_check
          %p533 = pneg %p276
        $region54: #{tpu_custom_call.1} parent=27 // pred_check_branch
          %535 = sbr.rel (%p533) target = $region56
        $region55: #{tpu_custom_call.1} parent=27 // pred_region
          %p536 = scmp.lt.s32.totalorder %s33, 1
          %s537 = scalar_select %p536, %s33, 1
          %s538 = scalar_lea.vmem %s9, %s537
        $region56: #{tpu_custom_call.1} parent=27 // pred_fallthru
          _
        // Predicated region
        $region57: #{tpu_custom_call.1} parent=27 // pred_check
          %p539 = pneg %p302
        $region58: #{tpu_custom_call.1} parent=27 // pred_check_branch
          %541 = sbr.rel (%p539) target = $region60
        $region59: #{tpu_custom_call.1} parent=27 // pred_region
          %p542 = scmp.lt.s32.totalorder %s33, 1
          %s543 = scalar_select %p542, %s33, 1
          %s544 = scalar_lea.vmem %s10, %s543
        $region60: #{tpu_custom_call.1} parent=27 // pred_fallthru
          _
        // Predicated region
        $region61: #{tpu_custom_call.1} parent=27 // pred_check
          %p545 = pneg %p328
        $region62: #{tpu_custom_call.1} parent=27 // pred_check_branch
          %547 = sbr.rel (%p545) target = $region64
        $region63: #{tpu_custom_call.1} parent=27 // pred_region
          %p548 = scmp.lt.s32.totalorder %s33, 1
          %s549 = scalar_select %p548, %s33, 1
          %s550 = scalar_lea.vmem %s11, %s549
        $region64: #{tpu_custom_call.1} parent=27 // pred_fallthru
          _
        // Predicated region
        $region65: #{tpu_custom_call.1} parent=27 // pred_check
          %p551 = pneg %p354
        $region66: #{tpu_custom_call.1} parent=27 // pred_check_branch
          %553 = sbr.rel (%p551) target = $region68
        $region67: #{tpu_custom_call.1} parent=27 // pred_region
          %p554 = scmp.lt.s32.totalorder %s33, 1
          %s555 = scalar_select %p554, %s33, 1
          %s556 = smul.addr %s555, 2
          %s557 = smul.addr %s556, 4
          %s558 = scalar_lea.vmem %s12, %s557
        $region68: #{tpu_custom_call.1} parent=27 // pred_fallthru
          _
        // Predicated region
        $region69: #{tpu_custom_call.1} parent=27 // pred_check
          %p559 = pneg %p380
        $region70: #{tpu_custom_call.1} parent=27 // pred_check_branch
          %561 = sbr.rel (%p559) target = $region72
        $region71: #{tpu_custom_call.1} parent=27 // pred_region
          %p562 = scmp.lt.s32.totalorder %s33, 1
          %s563 = scalar_select %p562, %s33, 1
          %s564 = scalar_lea.vmem %s13, %s563
        $region72: #{tpu_custom_call.1} parent=27 // pred_fallthru
          _
        // Predicated region
        $region73: #{tpu_custom_call.1} parent=27 // pred_check
          %p565 = pneg %p406
        $region74: #{tpu_custom_call.1} parent=27 // pred_check_branch
          %567 = sbr.rel (%p565) target = $region76
        $region75: #{tpu_custom_call.1} parent=27 // pred_region
          %p568 = scmp.lt.s32.totalorder %s33, 1
          %s569 = scalar_select %p568, %s33, 1
          %s570 = smul.addr %s569, 8
          %s571 = smul.addr %s570, 4
          %s572 = scalar_lea.vmem %s14, %s571
        $region76: #{tpu_custom_call.1} parent=27 // pred_fallthru
          _
        // Predicated region
        $region77: #{tpu_custom_call.1} parent=27 // pred_check
          %p573 = pneg %p432
        $region78: #{tpu_custom_call.1} parent=27 // pred_check_branch
          %575 = sbr.rel (%p573) target = $region80
        $region79: #{tpu_custom_call.1} parent=27 // pred_region
          %p576 = scmp.lt.s32.totalorder %s33, 1
          %s577 = scalar_select %p576, %s33, 1
          %s578 = scalar_lea.vmem %s15, %s577
        $region80: #{tpu_custom_call.1} parent=27 // pred_fallthru
          _
      $region28: #{tpu_custom_call.1} parent=5 // pred_fallthru
        _
      %p579 = scmp.le.s32.totalorder 1, %s25
      %p580 = scmp.lt.s32.totalorder %s25, 5
      %p581 = pnand %p579, %p580
      %p582 = pneg %p581
      // Predicated region
      $region81: #{tpu_custom_call.1} parent=5 // pred_check
        _
      $region82: #{tpu_custom_call.1} parent=5 // pred_check_branch
        %584 = sbr.rel (%p581) target = $region84
      $region83: #{tpu_custom_call.1} parent=5 // pred_region
        %s585 = ssub.s32 %s25, 1
        %p586 = scmp.lt.s32.totalorder %s34, 1
        %s587 = scalar_select %p586, %s34, 1
        %s588 = smul.addr %s587, 8
        %s589 = scalar_lea.vmem %s0, %s588
        %p590 = pneg %p63
        %p591 = pneg %p60
        %p592 = pneg %p84
        %p593 = pneg %p81
        %p594 = pneg %p105
        %p595 = pneg %p102
        %p596 = pneg %p126
        %p597 = pneg %p123
        %p598 = scmp.lt.s32.totalorder %s35, 1
        %s599 = scalar_select %p598, %s35, 1
        %s600 = scalar_lea.vmem %s4, %s599
        %p601 = pneg %p152
        %p602 = pneg %p149
        %p603 = scmp.lt.s32.totalorder %s35, 1
        %s604 = scalar_select %p603, %s35, 1
        %s605 = scalar_lea.vmem %s5, %s604
        %p606 = pneg %p178
        %p607 = pneg %p175
        %p608 = scmp.lt.s32.totalorder %s35, 1
        %s609 = scalar_select %p608, %s35, 1
        %s610 = smul.addr %s609, 2
        %s611 = smul.addr %s610, 4
        %s612 = scalar_lea.vmem %s6, %s611
        %p613 = pneg %p204
        %p614 = pneg %p201
        %p615 = scmp.lt.s32.totalorder %s35, 1
        %s616 = scalar_select %p615, %s35, 1
        %s617 = scalar_lea.vmem %s7, %s616
        %p618 = pneg %p230
        %p619 = pneg %p227
        %p620 = scmp.lt.s32.totalorder %s35, 1
        %s621 = scalar_select %p620, %s35, 1
        %s622 = smul.addr %s621, 2
        %s623 = smul.addr %s622, 4
        %s624 = scalar_lea.vmem %s8, %s623
        %p625 = pneg %p256
        %p626 = pneg %p253
        %p627 = scmp.lt.s32.totalorder %s35, 1
        %s628 = scalar_select %p627, %s35, 1
        %s629 = scalar_lea.vmem %s9, %s628
        %p630 = pneg %p282
        %p631 = pneg %p279
        %p632 = scmp.lt.s32.totalorder %s35, 1
        %s633 = scalar_select %p632, %s35, 1
        %s634 = scalar_lea.vmem %s10, %s633
        %p635 = pneg %p308
        %p636 = pneg %p305
        %p637 = scmp.lt.s32.totalorder %s35, 1
        %s638 = scalar_select %p637, %s35, 1
        %s639 = scalar_lea.vmem %s11, %s638
        %p640 = pneg %p334
        %p641 = pneg %p331
        %p642 = scmp.lt.s32.totalorder %s35, 1
        %s643 = scalar_select %p642, %s35, 1
        %s644 = smul.addr %s643, 2
        %s645 = smul.addr %s644, 4
        %s646 = scalar_lea.vmem %s12, %s645
        %p647 = pneg %p360
        %p648 = pneg %p357
        %p649 = scmp.lt.s32.totalorder %s35, 1
        %s650 = scalar_select %p649, %s35, 1
        %s651 = scalar_lea.vmem %s13, %s650
        %p652 = pneg %p386
        %p653 = pneg %p383
        %p654 = scmp.lt.s32.totalorder %s35, 1
        %s655 = scalar_select %p654, %s35, 1
        %s656 = smul.addr %s655, 8
        %s657 = smul.addr %s656, 4
        %s658 = scalar_lea.vmem %s14, %s657
        %p659 = pneg %p412
        %p660 = pneg %p409
        %p661 = scmp.lt.s32.totalorder %s35, 1
        %s662 = scalar_select %p661, %s35, 1
        %s663 = scalar_lea.vmem %s15, %s662
        %p664 = pneg %p438
        %p665 = pneg %p435
        %p666 = pneg %p464
        %p667 = pneg %p461
        %s668 = sand.u32 %s451, 1
        %s669 = scalar_lea.sflag [#allocation3], %s668
        %s670 = sand.u32 %s451, 1
        %s671 = smul.addr %s670, 8
        %s672 = scalar_lea.vmem [#allocation2], %s671
        %p673 = scmp.lt.s32.totalorder %s34, 1
        %s674 = scalar_select %p673, %s34, 1
        %s675 = smul.addr %s674, 8
        %s676 = scalar_lea.vmem %s0, %s675
        %p677 = scmp.lt.s32.totalorder %s35, 1
        %s678 = scalar_select %p677, %s35, 1
        %s679 = scalar_lea.vmem %s4, %s678
        %p680 = scmp.lt.s32.totalorder %s35, 1
        %s681 = scalar_select %p680, %s35, 1
        %s682 = scalar_lea.vmem %s5, %s681
        %p683 = scmp.lt.s32.totalorder %s35, 1
        %s684 = scalar_select %p683, %s35, 1
        %s685 = smul.addr %s684, 2
        %s686 = smul.addr %s685, 4
        %s687 = scalar_lea.vmem %s6, %s686
        %p688 = scmp.lt.s32.totalorder %s35, 1
        %s689 = scalar_select %p688, %s35, 1
        %s690 = scalar_lea.vmem %s7, %s689
        %p691 = scmp.lt.s32.totalorder %s35, 1
        %s692 = scalar_select %p691, %s35, 1
        %s693 = smul.addr %s692, 2
        %s694 = smul.addr %s693, 4
        %s695 = scalar_lea.vmem %s8, %s694
        %p696 = scmp.lt.s32.totalorder %s35, 1
        %s697 = scalar_select %p696, %s35, 1
        %s698 = scalar_lea.vmem %s9, %s697
        %p699 = scmp.lt.s32.totalorder %s35, 1
        %s700 = scalar_select %p699, %s35, 1
        %s701 = scalar_lea.vmem %s10, %s700
        %p702 = scmp.lt.s32.totalorder %s35, 1
        %s703 = scalar_select %p702, %s35, 1
        %s704 = scalar_lea.vmem %s11, %s703
        %p705 = scmp.lt.s32.totalorder %s35, 1
        %s706 = scalar_select %p705, %s35, 1
        %s707 = smul.addr %s706, 2
        %s708 = smul.addr %s707, 4
        %s709 = scalar_lea.vmem %s12, %s708
        %p710 = scmp.lt.s32.totalorder %s35, 1
        %s711 = scalar_select %p710, %s35, 1
        %s712 = scalar_lea.vmem %s13, %s711
        %p713 = scmp.lt.s32.totalorder %s35, 1
        %s714 = scalar_select %p713, %s35, 1
        %s715 = smul.addr %s714, 8
        %s716 = smul.addr %s715, 4
        %s717 = scalar_lea.vmem %s14, %s716
        %p718 = scmp.lt.s32.totalorder %s35, 1
        %s719 = scalar_select %p718, %s35, 1
        %s720 = scalar_lea.vmem %s15, %s719
        %p722 = scmp.eq.s32.totalorder %s35, 0
        // Predicated region
        $region85: #{tpu_custom_call.1} parent=83 // pred_check
          %p723 = pneg %p722
        $region86: #{tpu_custom_call.1} parent=83 // pred_check_branch
          %725 = sbr.rel (%p723) target = $region88
        $region87: #{tpu_custom_call.1} parent=83 // pred_region
          %v726 = vld [vmem:[%s676] sm:$0xff]
          %v727 = vld [vmem:[%s1] sm:$0xff]
          %v728 = vadd.f32 %v726, %v727
          %v729 = vpack.c.bf16 %v728, %v728
          %v730 = vld [vmem:[%s2] sm:$0x3]
          %v731 = vld [vmem:[%s3] sm:$0x1]
          %v733 = vperm.slane %v731, 0
          %vm735 = vcmask 31744
          %v737 = vsel %vm735, %v729, 0
          %vm739 = vcmask 1041408
          %v741 = vsel %vm739, %v730, 0
          %743 = vmatpush.bf16.msra.mxu0 0
          %744 = vmatpush.bf16.msra.mxu0 0
          %745 = vmatpush.bf16.msra.mxu0 0
          %746 = vmatpush.bf16.msra.mxu0 0
          %747 = vmatpush.bf16.msra.mxu0 0
          %748 = vmatpush.bf16.msra.mxu0 0
          %749 = vmatpush.bf16.msra.mxu0 0
          %750 = vmatpush.bf16.msra.mxu0 %v741
          %751 = vmatmul.bf16.gmra.mxu0 %v737
          %v752 = vpop.f32.mrf.mxu0
          %v753 = vadd.f32 %v733, %v752
          %v754 = vpop.f32.mrf.mxu0
          %755 = vdwg.mxu0
          %vm756 = vcmask 130048
          %757 = vst.msk [vmem:[%s672] sm:$0xff] %vm756, %v753
        $region88: #{tpu_custom_call.1} parent=83 // pred_fallthru
          _
        %v758 = vld [vmem:[%s672] sm:$0xff]
        %v759 = vld [vmem:[%s679] sm:$0x1]
        %v760 = vld [vmem:[%s682] sm:$0x1]
        %vm761 = vcmask 130048
        %v762 = vsel %vm761, %v758, 0.0
        %763 = vadd.xlane.f32.xlu0 %v762
        %v764 = vpop.xlane.xlu0 %763
        %v765 = vrcp.pop 16.0
        %v766 = vmul.f32 16.0, %v765
        %v767 = vsub.f32 1.0, %v766
        %v768 = vmul.f32 %v765, %v767
        %v769 = vadd.f32 %v765, %v768
        %vm770 = vweird.f32 %v765
        %v771 = vsel %vm770, %v765, %v769
        %v772 = vmul.f32 %v764, %v771
        %v773 = vsub.f32 %v758, %v772
        %v774 = vmul.f32 %v773, %v773
        %v775 = vsel %vm761, %v774, 0.0
        %776 = vadd.xlane.f32.xlu0 %v775
        %v777 = vpop.xlane.xlu0 %776
        %v778 = vmul.f32 %v777, %v771
        %v779 = vadd.f32 %v778, 1e-05
        %v780 = vrsqrt.pop %v779
        %v781 = vmul.f32 %v780, %v779
        %v782 = vmul.f32 %v781, %v780
        %v783 = vmul.f32 0.5, %v782
        %v784 = vsub.f32 1.5, %v783
        %v785 = vmul.f32 %v780, %v784
        %vm786 = vweird.f32 %v779
        %vm787 = vweird.f32 %v780
        %vm788 = vmor %vm786, %vm787
        %v789 = vsel %vm788, %v780, %v785
        %v790 = vmul.f32 %v773, %v789
        %v792 = vperm.slane %v759, 0
        %v794 = vmul.f32 %v790, %v792
        %v796 = vperm.slane %v760, 0
        %v798 = vadd.f32 %v794, %v796
        %v799 = vpack.c.bf16 %v798, %v798
        %v800 = vld [vmem:[%s687] sm:$0xf]
        %v801 = vld [vmem:[%s687 + $0x4] sm:$0xf]
        %v802 = vld [vmem:[%s690] sm:$0x1]
        %v804 = vperm.slane %v802, 0
        %v808 = vunpack.c.l.b16 %v800
        %v809 = vunpack.c.l.b16 %v801
        %v810 = vpack.c.b16 %v809, %v808
        %v813 = vsel %vm761, %v799, 0
        %815 = vmatpush.bf16.msra.mxu0 0
        %816 = vmatpush.bf16.msra.mxu0 0
        %817 = vmatpush.bf16.msra.mxu0 0
        %818 = vmatpush.bf16.msra.mxu0 0
        %819 = vmatpush.bf16.msra.mxu0 0
        %820 = vmatpush.bf16.msra.mxu0 0
        %821 = vmatpush.bf16.msra.mxu0 0
        %822 = vmatpush.bf16.msra.mxu0 %v810
        %823 = vmatmul.bf16.gmra.mxu0 %v813
        %v824 = vpop.f32.mrf.mxu0
        %v825 = vadd.f32 %v804, %v824
        %v826 = vpop.f32.mrf.mxu0
        %827 = vdwg.mxu0
        %v828 = vpack.c.bf16 %v825, %v825
        %v829 = vld [vmem:[%s698] sm:$0x1]
        %v831 = vunpack.c.l.b16 %v828
        %v832 = vpack.c.b16 %v831, %v831
        %833 = vrot.lane.b32.xlu0 %v832, 112
        %v834 = vpop.permute.xlu0 %833
        %vm835 = vcmask 64512
        %v837 = vsel %vm835, %v828, 0
        %v840 = vsel %vm835, %v834, 0
        %842 = vmatpush.bf16.xpose.msra.mxu0 0
        %843 = vmatpush.bf16.xpose.msra.mxu0 0
        %844 = vmatpush.bf16.xpose.msra.mxu0 0
        %845 = vmatpush.bf16.xpose.msra.mxu0 0
        %846 = vmatpush.bf16.xpose.msra.mxu0 0
        %847 = vmatpush.bf16.xpose.msra.mxu0 0
        %848 = vmatpush.bf16.xpose.msra.mxu0 0
        %849 = vmatpush.bf16.xpose.msra.mxu0 %v840
        %850 = vmatmul.bf16.gmra.mxu0 %v837
        %v851 = vpop.f32.mrf.mxu0
        %v852 = vadd.f32 0.0, %v851
        %v853 = vpop.f32.mrf.mxu0
        %854 = vdwg.mxu0
        %v855 = vmul.f32 %v852, 0.25
        %v856 = vsel %vm835, %v855, -inf
        %857 = vmax.xlane.f32.xlu0 %v856
        %v858 = vpop.xlane.xlu0 %857
        %v859 = vsub.f32 %v855, %v858
        %v860 = vmul.f32 %v859, 1.442695
        %v861 = vpow.pop %v860
        %v862 = vsel %vm835, %v861, 0.0
        %863 = vadd.xlane.f32.xlu0 %v862
        %v864 = vpop.xlane.xlu0 %863
        %v865 = vrcp.pop %v864
        %v866 = vmul.f32 %v861, %v865
        %v867 = vpack.c.bf16 %v866, %v866
        %868 = vrot.lane.b32.xlu0 %v832, 96
        %v869 = vpop.permute.xlu0 %868
        %v871 = vsel %vm835, %v867, 0
        %vm873 = vcmask 1043456
        %v875 = vsel %vm873, %v869, 0
        %877 = vmatpush.bf16.msra.mxu0 0
        %878 = vmatpush.bf16.msra.mxu0 0
        %879 = vmatpush.bf16.msra.mxu0 0
        %880 = vmatpush.bf16.msra.mxu0 0
        %881 = vmatpush.bf16.msra.mxu0 0
        %882 = vmatpush.bf16.msra.mxu0 0
        %883 = vmatpush.bf16.msra.mxu0 0
        %884 = vmatpush.bf16.msra.mxu0 %v875
        %885 = vmatmul.bf16.gmra.mxu0 %v871
        %v886 = vpop.f32.mrf.mxu0
        %v887 = vadd.f32 0.0, %v886
        %v888 = vpop.f32.mrf.mxu0
        %889 = vdwg.mxu0
        %v890 = vpack.c.bf16 %v887, %v887
        %v891 = vld [vmem:[%s695] sm:$0xf]
        %v893 = vsel %vm835, %v890, 0
        %v896 = vsel %vm873, %v891, 0
        %898 = vmatpush.bf16.msra.mxu0 0
        %899 = vmatpush.bf16.msra.mxu0 0
        %900 = vmatpush.bf16.msra.mxu0 0
        %901 = vmatpush.bf16.msra.mxu0 0
        %902 = vmatpush.bf16.msra.mxu0 0
        %903 = vmatpush.bf16.msra.mxu0 0
        %904 = vmatpush.bf16.msra.mxu0 0
        %905 = vmatpush.bf16.msra.mxu0 %v896
        %906 = vmatmul.bf16.gmra.mxu0 %v893
        %v907 = vpop.f32.mrf.mxu0
        %v908 = vadd.f32 0.0, %v907
        %v909 = vpop.f32.mrf.mxu0
        %910 = vdwg.mxu0
        %v912 = vperm.slane %v829, 0
        %v914 = vadd.f32 %v912, %v908
        %915 = vrot.lane.b32.xlu0 %v832, 120
        %v916 = vpop.permute.xlu0 %915
        %917 = vrot.lane.b32.xlu0 %v832, 104
        %v918 = vpop.permute.xlu0 %917
        %v920 = vsel %vm835, %v916, 0
        %v923 = vsel %vm835, %v918, 0
        %925 = vmatpush.bf16.xpose.msra.mxu0 0
        %926 = vmatpush.bf16.xpose.msra.mxu0 0
        %927 = vmatpush.bf16.xpose.msra.mxu0 0
        %928 = vmatpush.bf16.xpose.msra.mxu0 0
        %929 = vmatpush.bf16.xpose.msra.mxu0 0
        %930 = vmatpush.bf16.xpose.msra.mxu0 0
        %931 = vmatpush.bf16.xpose.msra.mxu0 0
        %932 = vmatpush.bf16.xpose.msra.mxu0 %v923
        %933 = vmatmul.bf16.gmra.mxu0 %v920
        %v934 = vpop.f32.mrf.mxu0
        %v935 = vadd.f32 0.0, %v934
        %v936 = vpop.f32.mrf.mxu0
        %937 = vdwg.mxu0
        %v938 = vmul.f32 %v935, 0.25
        %v939 = vsel %vm835, %v938, -inf
        %940 = vmax.xlane.f32.xlu0 %v939
        %v941 = vpop.xlane.xlu0 %940
        %v942 = vsub.f32 %v938, %v941
        %v943 = vmul.f32 %v942, 1.442695
        %v944 = vpow.pop %v943
        %v945 = vsel %vm835, %v944, 0.0
        %946 = vadd.xlane.f32.xlu0 %v945
        %v947 = vpop.xlane.xlu0 %946
        %v948 = vrcp.pop %v947
        %v949 = vmul.f32 %v944, %v948
        %v950 = vpack.c.bf16 %v949, %v949
        %951 = vrot.lane.b32.xlu0 %v832, 88
        %v952 = vpop.permute.xlu0 %951
        %v954 = vsel %vm835, %v950, 0
        %v957 = vsel %vm873, %v952, 0
        %959 = vmatpush.bf16.msra.mxu0 0
        %960 = vmatpush.bf16.msra.mxu0 0
        %961 = vmatpush.bf16.msra.mxu0 0
        %962 = vmatpush.bf16.msra.mxu0 0
        %963 = vmatpush.bf16.msra.mxu0 0
        %964 = vmatpush.bf16.msra.mxu0 0
        %965 = vmatpush.bf16.msra.mxu0 0
        %966 = vmatpush.bf16.msra.mxu0 %v957
        %967 = vmatmul.bf16.gmra.mxu0 %v954
        %v968 = vpop.f32.mrf.mxu0
        %v969 = vadd.f32 0.0, %v968
        %v970 = vpop.f32.mrf.mxu0
        %971 = vdwg.mxu0
        %v972 = vpack.c.bf16 %v969, %v969
        %v973 = vld [vmem:[%s695 + $0x4] sm:$0xf]
        %v975 = vsel %vm835, %v972, 0
        %v978 = vsel %vm873, %v973, 0
        %980 = vmatpush.bf16.msra.mxu0 0
        %981 = vmatpush.bf16.msra.mxu0 0
        %982 = vmatpush.bf16.msra.mxu0 0
        %983 = vmatpush.bf16.msra.mxu0 0
        %984 = vmatpush.bf16.msra.mxu0 0
        %985 = vmatpush.bf16.msra.mxu0 0
        %986 = vmatpush.bf16.msra.mxu0 0
        %987 = vmatpush.bf16.msra.mxu0 %v978
        %988 = vmatmul.bf16.gmra.mxu0 %v975
        %v989 = vpop.f32.mrf.mxu0
        %v990 = vadd.f32 0.0, %v989
        %v991 = vpop.f32.mrf.mxu0
        %992 = vdwg.mxu0
        %v993 = vadd.f32 %v914, %v990
        %v994 = vadd.f32 %v758, %v993
        %v995 = vld [vmem:[%s701] sm:$0x1]
        %v996 = vld [vmem:[%s704] sm:$0x1]
        %v997 = vsel %vm761, %v994, 0.0
        %998 = vadd.xlane.f32.xlu0 %v997
        %v999 = vpop.xlane.xlu0 %998
        %v1000 = vmul.f32 %v999, %v771
        %v1001 = vsub.f32 %v994, %v1000
        %v1002 = vmul.f32 %v1001, %v1001
        %v1003 = vsel %vm761, %v1002, 0.0
        %1004 = vadd.xlane.f32.xlu0 %v1003
        %v1005 = vpop.xlane.xlu0 %1004
        %v1006 = vmul.f32 %v1005, %v771
        %v1007 = vadd.f32 %v1006, 1e-05
        %v1008 = vrsqrt.pop %v1007
        %v1009 = vmul.f32 %v1008, %v1007
        %v1010 = vmul.f32 %v1009, %v1008
        %v1011 = vmul.f32 0.5, %v1010
        %v1012 = vsub.f32 1.5, %v1011
        %v1013 = vmul.f32 %v1008, %v1012
        %vm1014 = vweird.f32 %v1007
        %vm1015 = vweird.f32 %v1008
        %vm1016 = vmor %vm1014, %vm1015
        %v1017 = vsel %vm1016, %v1008, %v1013
        %v1018 = vmul.f32 %v1001, %v1017
        %v1020 = vperm.slane %v995, 0
        %v1022 = vmul.f32 %v1018, %v1020
        %v1024 = vperm.slane %v996, 0
        %v1026 = vadd.f32 %v1022, %v1024
        %v1027 = vpack.c.bf16 %v1026, %v1026
        %v1028 = vld [vmem:[%s709] sm:$0xf]
        %v1029 = vld [vmem:[%s709 + $0x4] sm:$0xf]
        %v1030 = vld [vmem:[%s712] sm:$0x1]
        %v1032 = vperm.slane %v1030, 0
        %v1036 = vunpack.c.l.b16 %v1028
        %v1037 = vunpack.c.l.b16 %v1029
        %v1038 = vpack.c.b16 %v1037, %v1036
        %v1041 = vsel %vm761, %v1027, 0
        %1043 = vmatpush.bf16.msra.mxu0 0
        %1044 = vmatpush.bf16.msra.mxu0 0
        %1045 = vmatpush.bf16.msra.mxu0 0
        %1046 = vmatpush.bf16.msra.mxu0 0
        %1047 = vmatpush.bf16.msra.mxu0 0
        %1048 = vmatpush.bf16.msra.mxu0 0
        %1049 = vmatpush.bf16.msra.mxu0 0
        %1050 = vmatpush.bf16.msra.mxu0 %v1038
        %1051 = vmatmul.bf16.gmra.mxu0 %v1041
        %v1052 = vpop.f32.mrf.mxu0
        %v1053 = vadd.f32 %v1032, %v1052
        %v1054 = vpop.f32.mrf.mxu0
        %1055 = vdwg.mxu0
        %v1056 = vmul.f32 %v1053, 0.5
        %v1057 = vmul.f32 %v1053, 0.044715
        %v1058 = vmul.f32 %v1057, %v1053
        %v1059 = vmul.f32 %v1058, %v1053
        %v1060 = vadd.f32 %v1053, %v1059
        %v1061 = vmul.f32 %v1060, 0.7978846
        %v1062 = vtanh.pop %v1061
        %v1063 = vadd.f32 %v1062, 1.0
        %v1064 = vmul.f32 %v1056, %v1063
        %v1065 = vpack.c.bf16 %v1064, %v1064
        %v1066 = vld [vmem:[%s717] sm:$0xf]
        %v1067 = vld [vmem:[%s717 + $0x4] sm:$0xf]
        %v1068 = vld [vmem:[%s717 + $0x8] sm:$0xf]
        %v1069 = vld [vmem:[%s717 + $0xc] sm:$0xf]
        %v1070 = vld [vmem:[%s717 + $0x10] sm:$0xf]
        %v1071 = vld [vmem:[%s717 + $0x14] sm:$0xf]
        %v1072 = vld [vmem:[%s717 + $0x18] sm:$0xf]
        %v1073 = vld [vmem:[%s717 + $0x1c] sm:$0xf]
        %v1074 = vld [vmem:[%s720] sm:$0x1]
        %v1076 = vperm.slane %v1074, 0
        %v1086 = vunpack.c.l.b16 %v1066
        %v1087 = vunpack.c.l.b16 %v1067
        %v1088 = vunpack.c.l.b16 %v1068
        %v1089 = vunpack.c.l.b16 %v1069
        %v1090 = vunpack.c.l.b16 %v1070
        %v1091 = vunpack.c.l.b16 %v1071
        %v1092 = vunpack.c.l.b16 %v1072
        %v1093 = vunpack.c.l.b16 %v1073
        %v1094 = vpack.c.b16 %v1087, %v1086
        %v1095 = vpack.c.b16 %v1089, %v1088
        %v1096 = vpack.c.b16 %v1091, %v1090
        %v1097 = vpack.c.b16 %v1093, %v1092
        %vm1102 = vcmask 523264
        %v1104 = vsel %vm1102, %v1065, 0
        %1106 = vmatpush.bf16.msra.mxu0 0
        %1107 = vmatpush.bf16.msra.mxu0 0
        %1108 = vmatpush.bf16.msra.mxu0 0
        %1109 = vmatpush.bf16.msra.mxu0 0
        %1110 = vmatpush.bf16.msra.mxu0 %v1097
        %1111 = vmatpush.bf16.msra.mxu0 %v1096
        %1112 = vmatpush.bf16.msra.mxu0 %v1095
        %1113 = vmatpush.bf16.msra.mxu0 %v1094
        %1114 = vmatmul.bf16.gmra.mxu0 %v1104
        %v1115 = vpop.f32.mrf.mxu0
        %v1116 = vadd.f32 %v1076, %v1115
        %v1117 = vpop.f32.mrf.mxu0
        %1118 = vdwg.mxu0
        %v1119 = vadd.f32 %v994, %v1116
        %1120 = vst.msk [vmem:[%s672] sm:$0xff] %vm761, %v1119
        %s1121 = sand.u32 %s451, 1
        %s1122 = scalar_lea.sflag [#allocation3], %s1121
        %s1123 = sand.u32 %s451, 1
        %s1124 = smul.addr %s1123, 8
        %s1125 = scalar_lea.vmem [#allocation2], %s1124
        // Predicated region
        $region89: #{tpu_custom_call.1} parent=83 // pred_check
          %p1126 = pneg %p461
        $region90: #{tpu_custom_call.1} parent=83 // pred_check_branch
          %1128 = sbr.rel (%p1126) target = $region92
        $region91: #{tpu_custom_call.1} parent=83 // pred_region
          %1130 = vsyncadd %s1122, 0
          %s1131 = smul.addr %s34, 8
          %s1132 = scalar_lea.hbm %s16, %s1131
          %s1134 = sshll.u32 %s1125, 4
          %s1135 = int_to_ptr.vmem [resolvable:$true] %s1134
          %s1136 = sshll.u32 %s1132, 4
          %s1137 = int_to_ptr.hbm [resolvable:$true] %s1136
          %1139 = dma.vmem_to_hbm [thread:$0]  %s1135, 128, %s1137, %s1122
        $region92: #{tpu_custom_call.1} parent=83 // pred_fallthru
          _
      $region84: #{tpu_custom_call.1} parent=5 // pred_fallthru
        _
      %p1140 = scmp.le.s32.totalorder 2, %s25
      // Predicated region
      $region93: #{tpu_custom_call.1} parent=5 // pred_check
        %p1141 = pneg %p1140
      $region94: #{tpu_custom_call.1} parent=5 // pred_check_branch
        %1143 = sbr.rel (%p1141) target = $region96
      $region95: #{tpu_custom_call.1} parent=5 // pred_region
        %s1144 = ssub.s32 %s25, 2
        // Predicated region
        $region97: #{tpu_custom_call.1} parent=95 // pred_check
          %p1145 = pneg %p467
        $region98: #{tpu_custom_call.1} parent=95 // pred_check_branch
          %1147 = sbr.rel (%p1145) target = $region100
        $region99: #{tpu_custom_call.1} parent=95 // pred_region
          %s1148 = sand.u32 %s452, 1
          %s1149 = scalar_lea.sflag [#allocation3], %s1148
          %s1150 = sand.u32 %s452, 1
          %s1151 = smul.addr %s1150, 8
          %s1152 = scalar_lea.vmem [#allocation2], %s1151
          %1154 = dma.done %s1149, 128
        $region100: #{tpu_custom_call.1} parent=95 // pred_fallthru
          _
      $region96: #{tpu_custom_call.1} parent=5 // pred_fallthru
        _
    $region6: #{tpu_custom_call.1} parent=1 // loop_footer
      %s29 = sadd.s32 1, %s25
    $region7: #{tpu_custom_call.1} parent=1 // loop_footer_branch
      %24 = sbr.rel target = $region3
    $region8: #{tpu_custom_call.1} parent=1 // loop_exit
      _
    %1155 = vsyncpa [#allocation3], 1
    %s1156 = scalar_lea.sflag [#allocation3], 1
    %1157 = vsyncpa %s1156, 1

</llo_original>
